<compile_context>
chip_gen: v5e
topology: v5e:2x2
jax: 0.10.0
libtpu: 0.0.40
codegen_flags: <defaults>
</compile_context>

<pallas_src>
import jax
import jax.numpy as jnp
from jax.experimental import pallas as pl
from jax.experimental.pallas import tpu as pltpu


def _layer_norm(x, gamma, beta, eps=1e-5):
    mu = jnp.mean(x, axis=-1, keepdims=True)
    var = jnp.mean((x - mu) ** 2, axis=-1, keepdims=True)
    return (x - mu) * jax.lax.rsqrt(var + eps) * gamma + beta


def _make_kernel(n_heads, n_units, seq_len, compute_dtype):
    E = n_units
    H = n_heads
    dh = E // H
    T = seq_len
    scale = 1.0 / float(dh) ** 0.5
    cd = compute_dtype

    def kernel(src_ref, mb_ref,
               enc_w_ref, enc_b_ref, ln_e_g_ref, ln_e_b_ref,
               in_w_ref, in_b_ref, out_w_ref, out_b_ref,
               ln1_g_ref, ln1_b_ref,
               ff1_w_ref, ff1_b_ref, ff2_w_ref, ff2_b_ref,
               ln2_g_ref, ln2_b_ref,
               out_ref):
        # grid = (batch, layer).  out_ref's block index only depends on the batch axis,
        # so it stays resident in VMEM across all layers and carries h between layers.

        @pl.when(pl.program_id(1) == 0)
        def _():
            # input Linear(in_size, n_units) + LayerNorm, once per batch block.
            x = src_ref[...].astype(cd)                                     # (T, in)
            h0 = jnp.dot(x, enc_w_ref[...],
                         preferred_element_type=jnp.float32) + enc_b_ref[...]
            out_ref[...] = _layer_norm(h0, ln_e_g_ref[...], ln_e_b_ref[...])

        h = out_ref[...]                                                    # (T, E) f32
        mb = mb_ref[...]                                                    # (1, T) key-pad bias

        # ---- self attention: fused QKV projection, heads batched ----
        qkv = jnp.dot(h.astype(cd), in_w_ref[...],
                      preferred_element_type=jnp.float32) + in_b_ref[...]   # (T, 3E) f32
        q = pltpu.einshape("qhd->hqd", qkv[:, 0 * E:1 * E].reshape(T, H, dh))   # (H, T, dh)
        k = pltpu.einshape("khd->hkd", qkv[:, 1 * E:2 * E].reshape(T, H, dh))
        v = pltpu.einshape("khd->hkd", qkv[:, 2 * E:3 * E].reshape(T, H, dh))

        s = jnp.einsum('hqd,hkd->hqk', q.astype(cd), k.astype(cd),
                       preferred_element_type=jnp.float32) * scale          # (H, T, T)
        s = s + mb                                      # (1,T) broadcasts over heads/queries
        m = jnp.max(s, axis=-1, keepdims=True)
        p = jnp.exp(s - m)
        p = p * pl.reciprocal(jnp.sum(p, axis=-1, keepdims=True), approx=True)
        ctx = jnp.einsum('hqk,hkd->hqd', p.astype(cd), v.astype(cd),
                         preferred_element_type=jnp.float32)                # (H, T, dh)
        attn = pltpu.einshape("hqd->qhd", ctx).reshape(T, E)
        attn = jnp.dot(attn.astype(cd), out_w_ref[...],
                       preferred_element_type=jnp.float32) + out_b_ref[...]

        h = _layer_norm(h + attn, ln1_g_ref[...], ln1_b_ref[...])           # post-norm 1

        # ---- feed-forward ----
        ff = jnp.dot(h.astype(cd), ff1_w_ref[...],
                     preferred_element_type=jnp.float32) + ff1_b_ref[...]
        ff = jnp.maximum(ff, 0.0)                                           # relu
        ff = jnp.dot(ff.astype(cd), ff2_w_ref[...],
                     preferred_element_type=jnp.float32) + ff2_b_ref[...]

        out_ref[...] = _layer_norm(h + ff, ln2_g_ref[...], ln2_b_ref[...])  # post-norm 2

    return kernel


def eend_grid_forward(src, seq_lens, params, *, n_layers, n_heads, n_units,
                      compute_dtype=jnp.bfloat16):
    B, T, in_size = src.shape
    E, L, H = n_units, n_layers, n_heads
    dh = E // H
    F = params['ff1_w'].shape[1]
    cd = compute_dtype
    f32 = jnp.float32

    # key-padding mask (True for padded frames) -> additive bias 0 / -1e9, shape (B, 1, T)
    mask_bias = jnp.where(jnp.arange(T)[None, :] >= seq_lens[:, None],
                          -1e9, 0.0).astype(f32)[:, None, :]

    # host-side prep: transpose weights to (in, out) so the kernel does plain matmuls,
    # cast matmul weights to the MXU compute dtype, keep biases / LayerNorm params in f32.
    enc_w = params['enc_w'].T.astype(cd)                              # (in, E)
    enc_b = params['enc_b'].reshape(1, E).astype(f32)
    ln_e_g = params['ln_enc_g'].reshape(1, E).astype(f32)
    ln_e_b = params['ln_enc_b'].reshape(1, E).astype(f32)
    in_w = jnp.transpose(params['in_w'], (0, 2, 1)).astype(cd)        # (L, E, 3E)
    in_b = params['in_b'].reshape(L, 1, 3 * E).astype(f32)
    out_w = jnp.transpose(params['out_w'], (0, 2, 1)).astype(cd)      # (L, E, E)
    out_b = params['out_b'].reshape(L, 1, E).astype(f32)
    ln1_g = params['ln1_g'].reshape(L, 1, E).astype(f32)
    ln1_b = params['ln1_b'].reshape(L, 1, E).astype(f32)
    ff1_w = jnp.transpose(params['ff1_w'], (0, 2, 1)).astype(cd)      # (L, E, F)
    ff1_b = params['ff1_b'].reshape(L, 1, F).astype(f32)
    ff2_w = jnp.transpose(params['ff2_w'], (0, 2, 1)).astype(cd)      # (L, F, E)
    ff2_b = params['ff2_b'].reshape(L, 1, E).astype(f32)
    ln2_g = params['ln2_g'].reshape(L, 1, E).astype(f32)
    ln2_b = params['ln2_b'].reshape(L, 1, E).astype(f32)

    args = (src, mask_bias, enc_w, enc_b, ln_e_g, ln_e_b,
            in_w, in_b, out_w, out_b, ln1_g, ln1_b,
            ff1_w, ff1_b, ff2_w, ff2_b, ln2_g, ln2_b)

    const = lambda b, l: (0, 0)
    per_batch3 = lambda b, l: (b, 0, 0)
    per_layer3 = lambda b, l: (l, 0, 0)

    in_specs = [
        pl.BlockSpec((None, T, in_size), per_batch3),   # src
        pl.BlockSpec((None, 1, T), per_batch3),         # mask bias
        pl.BlockSpec((in_size, E), const),              # enc_w
        pl.BlockSpec((1, E), const),                    # enc_b
        pl.BlockSpec((1, E), const),                    # ln_enc gamma
        pl.BlockSpec((1, E), const),                    # ln_enc beta
        pl.BlockSpec((None, E, 3 * E), per_layer3),     # in_w   (per-layer)
        pl.BlockSpec((None, 1, 3 * E), per_layer3),     # in_b
        pl.BlockSpec((None, E, E), per_layer3),         # out_w
        pl.BlockSpec((None, 1, E), per_layer3),         # out_b
        pl.BlockSpec((None, 1, E), per_layer3),         # ln1 gamma
        pl.BlockSpec((None, 1, E), per_layer3),         # ln1 beta
        pl.BlockSpec((None, E, F), per_layer3),         # ff1_w
        pl.BlockSpec((None, 1, F), per_layer3),         # ff1_b
        pl.BlockSpec((None, F, E), per_layer3),         # ff2_w
        pl.BlockSpec((None, 1, E), per_layer3),         # ff2_b
        pl.BlockSpec((None, 1, E), per_layer3),         # ln2 gamma
        pl.BlockSpec((None, 1, E), per_layer3),         # ln2 beta
    ]
    out_specs = pl.BlockSpec((None, T, E), per_batch3)  # resident across the layer axis

    # explicit VMEM budget + cost estimate (sized from actual per-step buffers).
    w_item = jnp.dtype(cd).itemsize
    per_layer_w = (3 * E * E + E * E + 2 * E * F) * w_item + (3 * E + 6 * E + F) * 4
    enc_bytes = in_size * E * w_item + 3 * E * 4
    io_blocks = 2 * (T * in_size + T + T * E) * 4
    intermediates = (T * 3 * E + 3 * H * T * dh + 2 * H * T * T + T * F + 6 * T * E) * 4
    est_vmem = 2 * per_layer_w + enc_bytes + io_blocks + intermediates
    vmem_limit = int(min(max(2 * est_vmem, 16 * 2 ** 20), 56 * 2 ** 20))

    flops = B * (2 * T * in_size * E) + B * L * (
        8 * T * E * E + 4 * T * T * E + 4 * T * E * F)
    weight_bytes = sum(int(a.size) * a.dtype.itemsize for a in args[2:])
    cost = pl.CostEstimate(
        flops=int(flops),
        transcendentals=int(B * L * (H * T * T + H * T + 2 * T)),
        bytes_accessed=int(B * weight_bytes + src.size * src.dtype.itemsize
                           + mask_bias.size * 4 + B * T * E * 4))

    return pl.pallas_call(
        _make_kernel(H, E, T, cd),
        out_shape=jax.ShapeDtypeStruct((B, T, E), jnp.float32),
        grid=(B, L),
        in_specs=in_specs,
        out_specs=out_specs,
        compiler_params=pltpu.CompilerParams(
            dimension_semantics=("parallel", "arbitrary"),
            vmem_limit_bytes=vmem_limit),
        cost_estimate=cost,
    )(*args)


def _reference(src, seq_lens, params, *, n_layers, n_heads, n_units,
               compute_dtype=jnp.bfloat16):
    """Pure-JAX mirror of the kernel math (bf16 matmuls, f32 accumulation/LN/softmax)."""
    B, T, _ = src.shape
    E, H = n_units, n_heads
    dh = E // H
    scale = 1.0 / float(dh) ** 0.5
    cd = compute_dtype
    mb = jnp.where(jnp.arange(T)[None, :] >= seq_lens[:, None], -1e9, 0.0)

    def mm(x, w):  # w is PyTorch-layout (out, in)
        return jnp.einsum('...k,ok->...o', x.astype(cd), w.astype(cd),
                          preferred_element_type=jnp.float32)

    h = mm(src, params['enc_w']) + params['enc_b']
    h = _layer_norm(h, params['ln_enc_g'], params['ln_enc_b'])
    for l in range(n_layers):
        qkv = mm(h, params['in_w'][l]) + params['in_b'][l]
        q = qkv[..., :E].reshape(B, T, H, dh)
        k = qkv[..., E:2 * E].reshape(B, T, H, dh)
        v = qkv[..., 2 * E:].reshape(B, T, H, dh)
        s = jnp.einsum('bqhd,bkhd->bhqk', q.astype(cd), k.astype(cd),
                       preferred_element_type=jnp.float32) * scale
        s = s + mb[:, None, None, :]
        p = jax.nn.softmax(s, axis=-1)
        ctx = jnp.einsum('bhqk,bkhd->bqhd', p.astype(cd), v.astype(cd),
                         preferred_element_type=jnp.float32).reshape(B, T, E)
        attn = mm(ctx, params['out_w'][l]) + params['out_b'][l]
        h = _layer_norm(h + attn, params['ln1_g'][l], params['ln1_b'][l])
        ff = jnp.maximum(mm(h, params['ff1_w'][l]) + params['ff1_b'][l], 0.0)
        ff = mm(ff, params['ff2_w'][l]) + params['ff2_b'][l]
        h = _layer_norm(h + ff, params['ln2_g'][l], params['ln2_b'][l])
    return h


def init_params(key, in_size, n_units, n_heads, n_layers, dim_ff):
    E, F, L = n_units, dim_ff, n_layers
    ks = jax.random.split(key, 8)
    p = {}
    # matches EEND_GRID.init_weights(): encoder weight ~ U(-0.1, 0.1), bias zero
    p['enc_w'] = jax.random.uniform(ks[0], (E, in_size), jnp.float32, -0.1, 0.1)
    p['enc_b'] = jnp.zeros((E,), jnp.float32)
    p['ln_enc_g'] = jnp.ones((E,), jnp.float32)
    p['ln_enc_b'] = jnp.zeros((E,), jnp.float32)
    p['in_w'] = 0.05 * jax.random.normal(ks[1], (L, 3 * E, E), jnp.float32)
    p['in_b'] = 0.02 * jax.random.normal(ks[2], (L, 3 * E), jnp.float32)
    p['out_w'] = 0.05 * jax.random.normal(ks[3], (L, E, E), jnp.float32)
    p['out_b'] = 0.02 * jax.random.normal(ks[4], (L, E), jnp.float32)
    p['ln1_g'] = jnp.ones((L, E), jnp.float32)
    p['ln1_b'] = jnp.zeros((L, E), jnp.float32)
    p['ff1_w'] = 0.05 * jax.random.normal(ks[5], (L, F, E), jnp.float32)
    p['ff1_b'] = 0.02 * jax.random.normal(ks[6], (L, F), jnp.float32)
    p['ff2_w'] = 0.05 * jax.random.normal(ks[7], (L, E, F), jnp.float32)
    p['ff2_b'] = jnp.zeros((L, E), jnp.float32)
    p['ln2_g'] = jnp.ones((L, E), jnp.float32)
    p['ln2_b'] = jnp.zeros((L, E), jnp.float32)
    return p


if __name__ == "__main__":
    # small shapes consistent with the module's forward
    B, T = 2, 8
    in_size, n_units, n_heads, n_layers = 32, 32, 4, 2
    dim_feedforward = 64

    key = jax.random.PRNGKey(0)
    kx, kp = jax.random.split(key)
    src = jax.random.normal(kx, (B, T, in_size), jnp.float32)   # (batch, frames, in_size)
    seq_lens = jnp.array([8, 5], jnp.int32)
    params = init_params(kp, in_size, n_units, n_heads, n_layers, dim_feedforward)

    out = eend_grid_forward(src, seq_lens, params,
                            n_layers=n_layers, n_heads=n_heads, n_units=n_units)
    out = jax.block_until_ready(out)

    ref = _reference(src, seq_lens, params,
                     n_layers=n_layers, n_heads=n_heads, n_units=n_units)
    ref = jax.block_until_ready(ref)

    assert out.shape == (B, T, n_units)
    assert bool(jnp.isfinite(out).all())
    max_err = float(jnp.max(jnp.abs(out - ref)))
    assert max_err < 1e-2, f"max abs error {max_err}"
    print("KERNEL_OK")
</pallas_src>

<mosaic_0001>
module attributes {stable_mosaic.version = 11 : i64} {
  func.func @kernel(%arg0: i32, %arg1: i32, %arg2: memref<1x8x32xf32, #tpu.memory_space<vmem>>, %arg3: memref<1x1x8xf32, #tpu.memory_space<vmem>>, %arg4: memref<32x32xbf16, #tpu.memory_space<vmem>>, %arg5: memref<1x32xf32, #tpu.memory_space<vmem>>, %arg6: memref<1x32xf32, #tpu.memory_space<vmem>>, %arg7: memref<1x32xf32, #tpu.memory_space<vmem>>, %arg8: memref<1x32x96xbf16, #tpu.memory_space<vmem>>, %arg9: memref<1x1x96xf32, #tpu.memory_space<vmem>>, %arg10: memref<1x32x32xbf16, #tpu.memory_space<vmem>>, %arg11: memref<1x1x32xf32, #tpu.memory_space<vmem>>, %arg12: memref<1x1x32xf32, #tpu.memory_space<vmem>>, %arg13: memref<1x1x32xf32, #tpu.memory_space<vmem>>, %arg14: memref<1x32x64xbf16, #tpu.memory_space<vmem>>, %arg15: memref<1x1x64xf32, #tpu.memory_space<vmem>>, %arg16: memref<1x64x32xbf16, #tpu.memory_space<vmem>>, %arg17: memref<1x1x32xf32, #tpu.memory_space<vmem>>, %arg18: memref<1x1x32xf32, #tpu.memory_space<vmem>>, %arg19: memref<1x1x32xf32, #tpu.memory_space<vmem>>, %arg20: memref<1x8x32xf32, #tpu.memory_space<vmem>>) attributes {dimension_semantics = [#tpu.dimension_semantics<parallel>, #tpu.dimension_semantics<arbitrary>], iteration_bounds = array<i64: 2, 2>, scalar_prefetch = 0 : i64, scratch_operands = 0 : i64, tpu.core_type = #tpu.core_type<tc>, window_params = [{transform_indices = @transform_0, window_bounds = array<i64: 1, 8, 32>}, {transform_indices = @transform_1, window_bounds = array<i64: 1, 1, 8>}, {pipeline_mode = #tpu.pipeline_mode<synchronous>, transform_indices = @transform_2, window_bounds = array<i64: 32, 32>}, {pipeline_mode = #tpu.pipeline_mode<synchronous>, transform_indices = @transform_3, window_bounds = array<i64: 1, 32>}, {pipeline_mode = #tpu.pipeline_mode<synchronous>, transform_indices = @transform_4, window_bounds = array<i64: 1, 32>}, {pipeline_mode = #tpu.pipeline_mode<synchronous>, transform_indices = @transform_5, window_bounds = array<i64: 1, 32>}, {transform_indices = @transform_6, window_bounds = array<i64: 1, 32, 96>}, {transform_indices = @transform_7, window_bounds = array<i64: 1, 1, 96>}, {transform_indices = @transform_8, window_bounds = array<i64: 1, 32, 32>}, {transform_indices = @transform_9, window_bounds = array<i64: 1, 1, 32>}, {transform_indices = @transform_10, window_bounds = array<i64: 1, 1, 32>}, {transform_indices = @transform_11, window_bounds = array<i64: 1, 1, 32>}, {transform_indices = @transform_12, window_bounds = array<i64: 1, 32, 64>}, {transform_indices = @transform_13, window_bounds = array<i64: 1, 1, 64>}, {transform_indices = @transform_14, window_bounds = array<i64: 1, 64, 32>}, {transform_indices = @transform_15, window_bounds = array<i64: 1, 1, 32>}, {transform_indices = @transform_16, window_bounds = array<i64: 1, 1, 32>}, {transform_indices = @transform_17, window_bounds = array<i64: 1, 1, 32>}, {transform_indices = @transform_18, window_bounds = array<i64: 1, 8, 32>}]} {
    %c0_i32 = arith.constant 0 : i32
    %0 = arith.cmpi eq, %arg1, %c0_i32 : i32
    %1 = arith.extui %0 : i1 to i32
    %c0_i32_0 = arith.constant 0 : i32
    %2 = arith.cmpi ne, %1, %c0_i32_0 : i32
    scf.if %2 {
      %c0_64 = arith.constant 0 : index
      %c0_65 = arith.constant 0 : index
      %c0_66 = arith.constant 0 : index
      %130 = vector.load %arg2[%c0_64, %c0_65, %c0_66] : memref<1x8x32xf32, #tpu.memory_space<vmem>>, vector<1x8x32xf32>
      %131 = vector.shape_cast %130 : vector<1x8x32xf32> to vector<8x32xf32>
      %132 = arith.truncf %131 : vector<8x32xf32> to vector<8x32xbf16>
      %c0_67 = arith.constant 0 : index
      %c0_68 = arith.constant 0 : index
      %133 = vector.load %arg4[%c0_67, %c0_68] : memref<32x32xbf16, #tpu.memory_space<vmem>>, vector<32x32xbf16>
      %cst_69 = arith.constant dense<0.000000e+00> : vector<8x32xf32>
      %134 = tpu.matmul %132, %133, %cst_69 {dimension_numbers = #tpu.dot_dimension_numbers<[1], [0], [0], [1], [0, 0, 1, 1], [], []>} : vector<8x32xbf16>, vector<32x32xbf16>, vector<8x32xf32> -> vector<8x32xf32>
      %c0_70 = arith.constant 0 : index
      %c0_71 = arith.constant 0 : index
      %135 = vector.load %arg5[%c0_70, %c0_71] : memref<1x32xf32, #tpu.memory_space<vmem>>, vector<1x32xf32>
      %136 = vector.broadcast %135 : vector<1x32xf32> to vector<8x32xf32>
      %137 = arith.addf %134, %136 : vector<8x32xf32>
      %c0_72 = arith.constant 0 : index
      %c0_73 = arith.constant 0 : index
      %138 = vector.load %arg6[%c0_72, %c0_73] : memref<1x32xf32, #tpu.memory_space<vmem>>, vector<1x32xf32>
      %c0_74 = arith.constant 0 : index
      %c0_75 = arith.constant 0 : index
      %139 = vector.load %arg7[%c0_74, %c0_75] : memref<1x32xf32, #tpu.memory_space<vmem>>, vector<1x32xf32>
      %cst_76 = arith.constant dense<0.000000e+00> : vector<8xf32>
      %140 = vector.multi_reduction <add>, %137, %cst_76 [1] : vector<8x32xf32> to vector<8xf32>
      %141 = vector.shape_cast %140 : vector<8xf32> to vector<8x1xf32>
      %cst_77 = arith.constant 3.200000e+01 : f32
      %142 = vector.broadcast %cst_77 : f32 to vector<8x1xf32>
      %143 = arith.divf %141, %142 : vector<8x1xf32>
      %144 = vector.broadcast %143 : vector<8x1xf32> to vector<8x32xf32>
      %145 = arith.subf %137, %144 : vector<8x32xf32>
      %146 = arith.mulf %145, %145 : vector<8x32xf32>
      %cst_78 = arith.constant dense<0.000000e+00> : vector<8xf32>
      %147 = vector.multi_reduction <add>, %146, %cst_78 [1] : vector<8x32xf32> to vector<8xf32>
      %148 = vector.shape_cast %147 : vector<8xf32> to vector<8x1xf32>
      %cst_79 = arith.constant 3.200000e+01 : f32
      %149 = vector.broadcast %cst_79 : f32 to vector<8x1xf32>
      %150 = arith.divf %148, %149 : vector<8x1xf32>
      %151 = vector.broadcast %143 : vector<8x1xf32> to vector<8x32xf32>
      %152 = arith.subf %137, %151 : vector<8x32xf32>
      %cst_80 = arith.constant 9.99999974E-6 : f32
      %153 = vector.broadcast %cst_80 : f32 to vector<8x1xf32>
      %154 = arith.addf %150, %153 : vector<8x1xf32>
      %155 = math.rsqrt %154 : vector<8x1xf32>
      %156 = vector.broadcast %155 : vector<8x1xf32> to vector<8x32xf32>
      %157 = arith.mulf %152, %156 : vector<8x32xf32>
      %158 = vector.broadcast %138 : vector<1x32xf32> to vector<8x32xf32>
      %159 = arith.mulf %157, %158 : vector<8x32xf32>
      %160 = vector.broadcast %139 : vector<1x32xf32> to vector<8x32xf32>
      %161 = arith.addf %159, %160 : vector<8x32xf32>
      %c0_81 = arith.constant 0 : index
      %c0_82 = arith.constant 0 : index
      %c0_83 = arith.constant 0 : index
      %162 = vector.load %arg20[%c0_81, %c0_82, %c0_83] : memref<1x8x32xf32, #tpu.memory_space<vmem>>, vector<1x8x32xf32>
      %163 = vector.shape_cast %162 : vector<1x8x32xf32> to vector<8x32xf32>
      %164 = vector.shape_cast %161 : vector<8x32xf32> to vector<1x8x32xf32>
      tpu.vector_store %arg20[%c0_81, %c0_82, %c0_83], %164 {strides = array<i32>} : memref<1x8x32xf32, #tpu.memory_space<vmem>>, vector<1x8x32xf32>,
    } else {
    }
    %c0 = arith.constant 0 : index
    %c0_1 = arith.constant 0 : index
    %c0_2 = arith.constant 0 : index
    %3 = vector.load %arg20[%c0, %c0_1, %c0_2] : memref<1x8x32xf32, #tpu.memory_space<vmem>>, vector<1x8x32xf32>
    %4 = vector.shape_cast %3 : vector<1x8x32xf32> to vector<8x32xf32>
    %c0_3 = arith.constant 0 : index
    %c0_4 = arith.constant 0 : index
    %c0_5 = arith.constant 0 : index
    %5 = vector.load %arg3[%c0_3, %c0_4, %c0_5] : memref<1x1x8xf32, #tpu.memory_space<vmem>>, vector<1x1x8xf32>
    %6 = vector.shape_cast %5 : vector<1x1x8xf32> to vector<1x8xf32>
    %7 = arith.truncf %4 : vector<8x32xf32> to vector<8x32xbf16>
    %c0_6 = arith.constant 0 : index
    %c0_7 = arith.constant 0 : index
    %c0_8 = arith.constant 0 : index
    %8 = vector.load %arg8[%c0_6, %c0_7, %c0_8] : memref<1x32x96xbf16, #tpu.memory_space<vmem>>, vector<1x32x96xbf16>
    %9 = vector.shape_cast %8 : vector<1x32x96xbf16> to vector<32x96xbf16>
    %cst = arith.constant dense<0.000000e+00> : vector<8x96xf32>
    %10 = tpu.matmul %7, %9, %cst {dimension_numbers = #tpu.dot_dimension_numbers<[1], [0], [0], [1], [0, 0, 1, 1], [], []>} : vector<8x32xbf16>, vector<32x96xbf16>, vector<8x96xf32> -> vector<8x96xf32>
    %c0_9 = arith.constant 0 : index
    %c0_10 = arith.constant 0 : index
    %c0_11 = arith.constant 0 : index
    %11 = vector.load %arg9[%c0_9, %c0_10, %c0_11] : memref<1x1x96xf32, #tpu.memory_space<vmem>>, vector<1x1x96xf32>
    %12 = vector.shape_cast %11 : vector<1x1x96xf32> to vector<1x96xf32>
    %13 = vector.broadcast %12 : vector<1x96xf32> to vector<8x96xf32>
    %14 = arith.addf %10, %13 : vector<8x96xf32>
    %15 = vector.extract_strided_slice %14 {offsets = [0, 0], sizes = [8, 32], strides = [1, 1]} : vector<8x96xf32> to vector<8x32xf32>
    %16 = vector.shape_cast %15 : vector<8x32xf32> to vector<8x4x8xf32>
    %17 = tpu.transpose %16, [1, 0, 2] : vector<8x4x8xf32> -> vector<4x8x8xf32>
    %18 = vector.extract_strided_slice %14 {offsets = [0, 32], sizes = [8, 32], strides = [1, 1]} : vector<8x96xf32> to vector<8x32xf32>
    %19 = vector.shape_cast %18 : vector<8x32xf32> to vector<8x4x8xf32>
    %20 = tpu.transpose %19, [1, 0, 2] : vector<8x4x8xf32> -> vector<4x8x8xf32>
    %21 = vector.extract_strided_slice %14 {offsets = [0, 64], sizes = [8, 32], strides = [1, 1]} : vector<8x96xf32> to vector<8x32xf32>
    %22 = vector.shape_cast %21 : vector<8x32xf32> to vector<8x4x8xf32>
    %23 = tpu.transpose %22, [1, 0, 2] : vector<8x4x8xf32> -> vector<4x8x8xf32>
    %24 = arith.truncf %17 : vector<4x8x8xf32> to vector<4x8x8xbf16>
    %25 = arith.truncf %20 : vector<4x8x8xf32> to vector<4x8x8xbf16>
    "tpu.trace_start"() <{level = 10 : i32, message = "hqd,hkd->hqk"}> : () -> ()
    %cst_12 = arith.constant dense<0.000000e+00> : vector<4x8x8xf32>
    %26 = tpu.matmul %24, %25, %cst_12 {dimension_numbers = #tpu.dot_dimension_numbers<[2], [2], [1], [1], [0, 0, 0, 1, 1, 1], [0], [0]>} : vector<4x8x8xbf16>, vector<4x8x8xbf16>, vector<4x8x8xf32> -> vector<4x8x8xf32>
    "tpu.trace_stop"() : () -> ()
    %cst_13 = arith.constant 0.353553385 : f32
    %27 = vector.broadcast %cst_13 : f32 to vector<4x8x8xf32>
    %28 = arith.mulf %26, %27 : vector<4x8x8xf32>
    %29 = vector.shape_cast %6 : vector<1x8xf32> to vector<1x1x8xf32>
    %30 = vector.broadcast %29 : vector<1x1x8xf32> to vector<4x8x8xf32>
    %31 = arith.addf %28, %30 : vector<4x8x8xf32>
    %cst_14 = arith.constant dense<0xFF800000> : vector<4x8xf32>
    %32 = vector.multi_reduction <maximumf>, %31, %cst_14 [2] : vector<4x8x8xf32> to vector<4x8xf32>
    %33 = vector.shape_cast %32 : vector<4x8xf32> to vector<4x8x1xf32>
    %34 = vector.broadcast %33 : vector<4x8x1xf32> to vector<4x8x8xf32>
    %35 = arith.subf %31, %34 : vector<4x8x8xf32>
    %36 = math.exp %35 : vector<4x8x8xf32>
    %cst_15 = arith.constant dense<0.000000e+00> : vector<4x8xf32>
    %37 = vector.multi_reduction <add>, %36, %cst_15 [2] : vector<4x8x8xf32> to vector<4x8xf32>
    %38 = vector.shape_cast %37 : vector<4x8xf32> to vector<4x8x1xf32>
    %39 = tpu.reciprocal %38 {approx = true} : vector<4x8x1xf32> -> vector<4x8x1xf32>
    %40 = vector.broadcast %39 : vector<4x8x1xf32> to vector<4x8x8xf32>
    %41 = arith.mulf %36, %40 : vector<4x8x8xf32>
    %42 = arith.truncf %41 : vector<4x8x8xf32> to vector<4x8x8xbf16>
    %43 = arith.truncf %23 : vector<4x8x8xf32> to vector<4x8x8xbf16>
    "tpu.trace_start"() <{level = 10 : i32, message = "hqk,hkd->hqd"}> : () -> ()
    %cst_16 = arith.constant dense<0.000000e+00> : vector<4x8x8xf32>
    %44 = tpu.matmul %42, %43, %cst_16 {dimension_numbers = #tpu.dot_dimension_numbers<[2], [1], [1], [2], [0, 0, 0, 1, 1, 2], [0], [0]>} : vector<4x8x8xbf16>, vector<4x8x8xbf16>, vector<4x8x8xf32> -> vector<4x8x8xf32>
    "tpu.trace_stop"() : () -> ()
    %45 = tpu.transpose %44, [1, 0, 2] : vector<4x8x8xf32> -> vector<8x4x8xf32>
    %46 = vector.shape_cast %45 : vector<8x4x8xf32> to vector<8x32xf32>
    %47 = arith.truncf %46 : vector<8x32xf32> to vector<8x32xbf16>
    %c0_17 = arith.constant 0 : index
    %c0_18 = arith.constant 0 : index
    %c0_19 = arith.constant 0 : index
    %48 = vector.load %arg10[%c0_17, %c0_18, %c0_19] : memref<1x32x32xbf16, #tpu.memory_space<vmem>>, vector<1x32x32xbf16>
    %49 = vector.shape_cast %48 : vector<1x32x32xbf16> to vector<32x32xbf16>
    %cst_20 = arith.constant dense<0.000000e+00> : vector<8x32xf32>
    %50 = tpu.matmul %47, %49, %cst_20 {dimension_numbers = #tpu.dot_dimension_numbers<[1], [0], [0], [1], [0, 0, 1, 1], [], []>} : vector<8x32xbf16>, vector<32x32xbf16>, vector<8x32xf32> -> vector<8x32xf32>
    %c0_21 = arith.constant 0 : index
    %c0_22 = arith.constant 0 : index
    %c0_23 = arith.constant 0 : index
    %51 = vector.load %arg11[%c0_21, %c0_22, %c0_23] : memref<1x1x32xf32, #tpu.memory_space<vmem>>, vector<1x1x32xf32>
    %52 = vector.shape_cast %51 : vector<1x1x32xf32> to vector<1x32xf32>
    %53 = vector.broadcast %52 : vector<1x32xf32> to vector<8x32xf32>
    %54 = arith.addf %50, %53 : vector<8x32xf32>
    %55 = arith.addf %4, %54 : vector<8x32xf32>
    %c0_24 = arith.constant 0 : index
    %c0_25 = arith.constant 0 : index
    %c0_26 = arith.constant 0 : index
    %56 = vector.load %arg12[%c0_24, %c0_25, %c0_26] : memref<1x1x32xf32, #tpu.memory_space<vmem>>, vector<1x1x32xf32>
    %57 = vector.shape_cast %56 : vector<1x1x32xf32> to vector<1x32xf32>
    %c0_27 = arith.constant 0 : index
    %c0_28 = arith.constant 0 : index
    %c0_29 = arith.constant 0 : index
    %58 = vector.load %arg13[%c0_27, %c0_28, %c0_29] : memref<1x1x32xf32, #tpu.memory_space<vmem>>, vector<1x1x32xf32>
    %59 = vector.shape_cast %58 : vector<1x1x32xf32> to vector<1x32xf32>
    %cst_30 = arith.constant dense<0.000000e+00> : vector<8xf32>
    %60 = vector.multi_reduction <add>, %55, %cst_30 [1] : vector<8x32xf32> to vector<8xf32>
    %61 = vector.shape_cast %60 : vector<8xf32> to vector<8x1xf32>
    %cst_31 = arith.constant 3.200000e+01 : f32
    %62 = vector.broadcast %cst_31 : f32 to vector<8x1xf32>
    %63 = arith.divf %61, %62 : vector<8x1xf32>
    %64 = vector.broadcast %63 : vector<8x1xf32> to vector<8x32xf32>
    %65 = arith.subf %55, %64 : vector<8x32xf32>
    %66 = arith.mulf %65, %65 : vector<8x32xf32>
    %cst_32 = arith.constant dense<0.000000e+00> : vector<8xf32>
    %67 = vector.multi_reduction <add>, %66, %cst_32 [1] : vector<8x32xf32> to vector<8xf32>
    %68 = vector.shape_cast %67 : vector<8xf32> to vector<8x1xf32>
    %cst_33 = arith.constant 3.200000e+01 : f32
    %69 = vector.broadcast %cst_33 : f32 to vector<8x1xf32>
    %70 = arith.divf %68, %69 : vector<8x1xf32>
    %71 = vector.broadcast %63 : vector<8x1xf32> to vector<8x32xf32>
    %72 = arith.subf %55, %71 : vector<8x32xf32>
    %cst_34 = arith.constant 9.99999974E-6 : f32
    %73 = vector.broadcast %cst_34 : f32 to vector<8x1xf32>
    %74 = arith.addf %70, %73 : vector<8x1xf32>
    %75 = math.rsqrt %74 : vector<8x1xf32>
    %76 = vector.broadcast %75 : vector<8x1xf32> to vector<8x32xf32>
    %77 = arith.mulf %72, %76 : vector<8x32xf32>
    %78 = vector.broadcast %57 : vector<1x32xf32> to vector<8x32xf32>
    %79 = arith.mulf %77, %78 : vector<8x32xf32>
    %80 = vector.broadcast %59 : vector<1x32xf32> to vector<8x32xf32>
    %81 = arith.addf %79, %80 : vector<8x32xf32>
    %82 = arith.truncf %81 : vector<8x32xf32> to vector<8x32xbf16>
    %c0_35 = arith.constant 0 : index
    %c0_36 = arith.constant 0 : index
    %c0_37 = arith.constant 0 : index
    %83 = vector.load %arg14[%c0_35, %c0_36, %c0_37] : memref<1x32x64xbf16, #tpu.memory_space<vmem>>, vector<1x32x64xbf16>
    %84 = vector.shape_cast %83 : vector<1x32x64xbf16> to vector<32x64xbf16>
    %cst_38 = arith.constant dense<0.000000e+00> : vector<8x64xf32>
    %85 = tpu.matmul %82, %84, %cst_38 {dimension_numbers = #tpu.dot_dimension_numbers<[1], [0], [0], [1], [0, 0, 1, 1], [], []>} : vector<8x32xbf16>, vector<32x64xbf16>, vector<8x64xf32> -> vector<8x64xf32>
    %c0_39 = arith.constant 0 : index
    %c0_40 = arith.constant 0 : index
    %c0_41 = arith.constant 0 : index
    %86 = vector.load %arg15[%c0_39, %c0_40, %c0_41] : memref<1x1x64xf32, #tpu.memory_space<vmem>>, vector<1x1x64xf32>
    %87 = vector.shape_cast %86 : vector<1x1x64xf32> to vector<1x64xf32>
    %88 = vector.broadcast %87 : vector<1x64xf32> to vector<8x64xf32>
    %89 = arith.addf %85, %88 : vector<8x64xf32>
    %cst_42 = arith.constant 0.000000e+00 : f32
    %90 = vector.broadcast %cst_42 : f32 to vector<8x64xf32>
    %91 = arith.maximumf %89, %90 : vector<8x64xf32>
    %92 = arith.truncf %91 : vector<8x64xf32> to vector<8x64xbf16>
    %c0_43 = arith.constant 0 : index
    %c0_44 = arith.constant 0 : index
    %c0_45 = arith.constant 0 : index
    %93 = vector.load %arg16[%c0_43, %c0_44, %c0_45] : memref<1x64x32xbf16, #tpu.memory_space<vmem>>, vector<1x64x32xbf16>
    %94 = vector.shape_cast %93 : vector<1x64x32xbf16> to vector<64x32xbf16>
    %cst_46 = arith.constant dense<0.000000e+00> : vector<8x32xf32>
    %95 = tpu.matmul %92, %94, %cst_46 {dimension_numbers = #tpu.dot_dimension_numbers<[1], [0], [0], [1], [0, 0, 1, 1], [], []>} : vector<8x64xbf16>, vector<64x32xbf16>, vector<8x32xf32> -> vector<8x32xf32>
    %c0_47 = arith.constant 0 : index
    %c0_48 = arith.constant 0 : index
    %c0_49 = arith.constant 0 : index
    %96 = vector.load %arg17[%c0_47, %c0_48, %c0_49] : memref<1x1x32xf32, #tpu.memory_space<vmem>>, vector<1x1x32xf32>
    %97 = vector.shape_cast %96 : vector<1x1x32xf32> to vector<1x32xf32>
    %98 = vector.broadcast %97 : vector<1x32xf32> to vector<8x32xf32>
    %99 = arith.addf %95, %98 : vector<8x32xf32>
    %100 = arith.addf %81, %99 : vector<8x32xf32>
    %c0_50 = arith.constant 0 : index
    %c0_51 = arith.constant 0 : index
    %c0_52 = arith.constant 0 : index
    %101 = vector.load %arg18[%c0_50, %c0_51, %c0_52] : memref<1x1x32xf32, #tpu.memory_space<vmem>>, vector<1x1x32xf32>
    %102 = vector.shape_cast %101 : vector<1x1x32xf32> to vector<1x32xf32>
    %c0_53 = arith.constant 0 : index
    %c0_54 = arith.constant 0 : index
    %c0_55 = arith.constant 0 : index
    %103 = vector.load %arg19[%c0_53, %c0_54, %c0_55] : memref<1x1x32xf32, #tpu.memory_space<vmem>>, vector<1x1x32xf32>
    %104 = vector.shape_cast %103 : vector<1x1x32xf32> to vector<1x32xf32>
    %cst_56 = arith.constant dense<0.000000e+00> : vector<8xf32>
    %105 = vector.multi_reduction <add>, %100, %cst_56 [1] : vector<8x32xf32> to vector<8xf32>
    %106 = vector.shape_cast %105 : vector<8xf32> to vector<8x1xf32>
    %cst_57 = arith.constant 3.200000e+01 : f32
    %107 = vector.broadcast %cst_57 : f32 to vector<8x1xf32>
    %108 = arith.divf %106, %107 : vector<8x1xf32>
    %109 = vector.broadcast %108 : vector<8x1xf32> to vector<8x32xf32>
    %110 = arith.subf %100, %109 : vector<8x32xf32>
    %111 = arith.mulf %110, %110 : vector<8x32xf32>
    %cst_58 = arith.constant dense<0.000000e+00> : vector<8xf32>
    %112 = vector.multi_reduction <add>, %111, %cst_58 [1] : vector<8x32xf32> to vector<8xf32>
    %113 = vector.shape_cast %112 : vector<8xf32> to vector<8x1xf32>
    %cst_59 = arith.constant 3.200000e+01 : f32
    %114 = vector.broadcast %cst_59 : f32 to vector<8x1xf32>
    %115 = arith.divf %113, %114 : vector<8x1xf32>
    %116 = vector.broadcast %108 : vector<8x1xf32> to vector<8x32xf32>
    %117 = arith.subf %100, %116 : vector<8x32xf32>
    %cst_60 = arith.constant 9.99999974E-6 : f32
    %118 = vector.broadcast %cst_60 : f32 to vector<8x1xf32>
    %119 = arith.addf %115, %118 : vector<8x1xf32>
    %120 = math.rsqrt %119 : vector<8x1xf32>
    %121 = vector.broadcast %120 : vector<8x1xf32> to vector<8x32xf32>
    %122 = arith.mulf %117, %121 : vector<8x32xf32>
    %123 = vector.broadcast %102 : vector<1x32xf32> to vector<8x32xf32>
    %124 = arith.mulf %122, %123 : vector<8x32xf32>
    %125 = vector.broadcast %104 : vector<1x32xf32> to vector<8x32xf32>
    %126 = arith.addf %124, %125 : vector<8x32xf32>
    %c0_61 = arith.constant 0 : index
    %c0_62 = arith.constant 0 : index
    %c0_63 = arith.constant 0 : index
    %127 = vector.load %arg20[%c0_61, %c0_62, %c0_63] : memref<1x8x32xf32, #tpu.memory_space<vmem>>, vector<1x8x32xf32>
    %128 = vector.shape_cast %127 : vector<1x8x32xf32> to vector<8x32xf32>
    %129 = vector.shape_cast %126 : vector<8x32xf32> to vector<1x8x32xf32>
    tpu.vector_store %arg20[%c0_61, %c0_62, %c0_63], %129 {strides = array<i32>} : memref<1x8x32xf32, #tpu.memory_space<vmem>>, vector<1x8x32xf32>,
    return
  }
  func.func @transform_0(%arg0: i32, %arg1: i32) -> (i32, i32, i32) {
    %c0_i32 = arith.constant 0 : i32
    %c0_i32_0 = arith.constant 0 : i32
    %c0_i32_1 = arith.constant 0 : i32
    return %arg0, %c0_i32, %c0_i32_0 : i32, i32, i32
  }
  func.func @transform_1(%arg0: i32, %arg1: i32) -> (i32, i32, i32) {
    %c0_i32 = arith.constant 0 : i32
    %c0_i32_0 = arith.constant 0 : i32
    %c0_i32_1 = arith.constant 0 : i32
    return %arg0, %c0_i32, %c0_i32_0 : i32, i32, i32
  }
  func.func @transform_2(%arg0: i32, %arg1: i32) -> (i32, i32) {
    %c0_i32 = arith.constant 0 : i32
    %c0_i32_0 = arith.constant 0 : i32
    %c0_i32_1 = arith.constant 0 : i32
    return %c0_i32, %c0_i32_0 : i32, i32
  }
  func.func @transform_3(%arg0: i32, %arg1: i32) -> (i32, i32) {
    %c0_i32 = arith.constant 0 : i32
    %c0_i32_0 = arith.constant 0 : i32
    %c0_i32_1 = arith.constant 0 : i32
    return %c0_i32, %c0_i32_0 : i32, i32
  }
  func.func @transform_4(%arg0: i32, %arg1: i32) -> (i32, i32) {
    %c0_i32 = arith.constant 0 : i32
    %c0_i32_0 = arith.constant 0 : i32
    %c0_i32_1 = arith.constant 0 : i32
    return %c0_i32, %c0_i32_0 : i32, i32
  }
  func.func @transform_5(%arg0: i32, %arg1: i32) -> (i32, i32) {
    %c0_i32 = arith.constant 0 : i32
    %c0_i32_0 = arith.constant 0 : i32
    %c0_i32_1 = arith.constant 0 : i32
    return %c0_i32, %c0_i32_0 : i32, i32
  }
  func.func @transform_6(%arg0: i32, %arg1: i32) -> (i32, i32, i32) {
    %c0_i32 = arith.constant 0 : i32
    %c0_i32_0 = arith.constant 0 : i32
    %c0_i32_1 = arith.constant 0 : i32
    return %arg1, %c0_i32, %c0_i32_0 : i32, i32, i32
  }
  func.func @transform_7(%arg0: i32, %arg1: i32) -> (i32, i32, i32) {
    %c0_i32 = arith.constant 0 : i32
    %c0_i32_0 = arith.constant 0 : i32
    %c0_i32_1 = arith.constant 0 : i32
    return %arg1, %c0_i32, %c0_i32_0 : i32, i32, i32
  }
  func.func @transform_8(%arg0: i32, %arg1: i32) -> (i32, i32, i32) {
    %c0_i32 = arith.constant 0 : i32
    %c0_i32_0 = arith.constant 0 : i32
    %c0_i32_1 = arith.constant 0 : i32
    return %arg1, %c0_i32, %c0_i32_0 : i32, i32, i32
  }
  func.func @transform_9(%arg0: i32, %arg1: i32) -> (i32, i32, i32) {
    %c0_i32 = arith.constant 0 : i32
    %c0_i32_0 = arith.constant 0 : i32
    %c0_i32_1 = arith.constant 0 : i32
    return %arg1, %c0_i32, %c0_i32_0 : i32, i32, i32
  }
  func.func @transform_10(%arg0: i32, %arg1: i32) -> (i32, i32, i32) {
    %c0_i32 = arith.constant 0 : i32
    %c0_i32_0 = arith.constant 0 : i32
    %c0_i32_1 = arith.constant 0 : i32
    return %arg1, %c0_i32, %c0_i32_0 : i32, i32, i32
  }
  func.func @transform_11(%arg0: i32, %arg1: i32) -> (i32, i32, i32) {
    %c0_i32 = arith.constant 0 : i32
    %c0_i32_0 = arith.constant 0 : i32
    %c0_i32_1 = arith.constant 0 : i32
    return %arg1, %c0_i32, %c0_i32_0 : i32, i32, i32
  }
  func.func @transform_12(%arg0: i32, %arg1: i32) -> (i32, i32, i32) {
    %c0_i32 = arith.constant 0 : i32
    %c0_i32_0 = arith.constant 0 : i32
    %c0_i32_1 = arith.constant 0 : i32
    return %arg1, %c0_i32, %c0_i32_0 : i32, i32, i32
  }
  func.func @transform_13(%arg0: i32, %arg1: i32) -> (i32, i32, i32) {
    %c0_i32 = arith.constant 0 : i32
    %c0_i32_0 = arith.constant 0 : i32
    %c0_i32_1 = arith.constant 0 : i32
    return %arg1, %c0_i32, %c0_i32_0 : i32, i32, i32
  }
  func.func @transform_14(%arg0: i32, %arg1: i32) -> (i32, i32, i32) {
    %c0_i32 = arith.constant 0 : i32
    %c0_i32_0 = arith.constant 0 : i32
    %c0_i32_1 = arith.constant 0 : i32
    return %arg1, %c0_i32, %c0_i32_0 : i32, i32, i32
  }
  func.func @transform_15(%arg0: i32, %arg1: i32) -> (i32, i32, i32) {
    %c0_i32 = arith.constant 0 : i32
    %c0_i32_0 = arith.constant 0 : i32
    %c0_i32_1 = arith.constant 0 : i32
    return %arg1, %c0_i32, %c0_i32_0 : i32, i32, i32
  }
  func.func @transform_16(%arg0: i32, %arg1: i32) -> (i32, i32, i32) {
    %c0_i32 = arith.constant 0 : i32
    %c0_i32_0 = arith.constant 0 : i32
    %c0_i32_1 = arith.constant 0 : i32
    return %arg1, %c0_i32, %c0_i32_0 : i32, i32, i32
  }
  func.func @transform_17(%arg0: i32, %arg1: i32) -> (i32, i32, i32) {
    %c0_i32 = arith.constant 0 : i32
    %c0_i32_0 = arith.constant 0 : i32
    %c0_i32_1 = arith.constant 0 : i32
    return %arg1, %c0_i32, %c0_i32_0 : i32, i32, i32
  }
  func.func @transform_18(%arg0: i32, %arg1: i32) -> (i32, i32, i32) {
    %c0_i32 = arith.constant 0 : i32
    %c0_i32_0 = arith.constant 0 : i32
    %c0_i32_1 = arith.constant 0 : i32
    return %arg0, %c0_i32, %c0_i32_0 : i32, i32, i32
  }
}

</mosaic_0001>

<llo_original>
// kernel: tpu_custom_call.1
$region0: #{tpu_custom_call.1}
  #allocation0 [shape = 'u32[]', space=smem, size = 0x4, offset = 0x4, fixed_abs, tag = 'smem constant byte address 0x4 - core index']
  #allocation1 [shape = 'u32[72,128]{1,0:T(1,128)}', space=vmem, size = 0x9000, scoped, tag = 'internal scratch']
  %s0 = inlined_call_operand.hbm [shape: f32[2,8,32], index: 0, kind: input, shape index: {}]
  %s1 = inlined_call_operand.hbm [shape: f32[2,1,8], index: 1, kind: input, shape index: {}]
  %s2 = inlined_call_operand.hbm [shape: bf16[32,32], index: 2, kind: input, shape index: {}]
  %s3 = inlined_call_operand.vmem [shape: f32[1,32], index: 3, kind: input, shape index: {}]
  %s4 = inlined_call_operand.hbm [shape: f32[1,32], index: 4, kind: input, shape index: {}]
  %s5 = inlined_call_operand.hbm [shape: f32[1,32], index: 5, kind: input, shape index: {}]
  %s6 = inlined_call_operand.vmem [shape: bf16[2,32,96], index: 6, kind: input, shape index: {}]
  %s7 = inlined_call_operand.vmem [shape: f32[2,1,96], index: 7, kind: input, shape index: {}]
  %s8 = inlined_call_operand.vmem [shape: bf16[2,32,32], index: 8, kind: input, shape index: {}]
  %s9 = inlined_call_operand.vmem [shape: f32[2,1,32], index: 9, kind: input, shape index: {}]
  %s10 = inlined_call_operand.vmem [shape: f32[2,1,32], index: 10, kind: input, shape index: {}]
  %s11 = inlined_call_operand.vmem [shape: f32[2,1,32], index: 11, kind: input, shape index: {}]
  %s12 = inlined_call_operand.vmem [shape: bf16[2,32,64], index: 12, kind: input, shape index: {}]
  %s13 = inlined_call_operand.vmem [shape: f32[2,1,64], index: 13, kind: input, shape index: {}]
  %s14 = inlined_call_operand.vmem [shape: bf16[2,64,32], index: 14, kind: input, shape index: {}]
  %s15 = inlined_call_operand.vmem [shape: f32[2,1,32], index: 15, kind: input, shape index: {}]
  %s16 = inlined_call_operand.vmem [shape: f32[2,1,32], index: 16, kind: input, shape index: {}]
  %s17 = inlined_call_operand.hbm [shape: f32[2,1,32], index: 17, kind: input, shape index: {}]
  %s18 = inlined_call_operand.hbm [shape: f32[2,8,32], index: 18, kind: output, shape index: {}]
  %s19 = sld [smem:[#allocation0]]
  $region133: #{tpu_custom_call.1} parent=0
    _
  %s21 = ssub.s32 1, %s19
  %s22 = scalar_select 0, %s21, %s19
  $region1: #{tpu_custom_call.1} parent=0
    #allocation2 [shape = 'u8[8192]{0}', space=vmem, size = 0x2000, scoped, tag = 'input window, operand 0']
    #allocation3 [shape = 's32[2]{0}', space=sflag, size = 0x8, scoped, tag = 'scoped memory for tpu_custom_call.1']
    #allocation4 [shape = 's32[2]{0}', space=sflag, size = 0x8, scoped, tag = 'scoped memory for tpu_custom_call.1']
    #allocation5 [shape = 'u8[1024]{0}', space=vmem, size = 0x400, scoped, tag = 'input window, operand 1']
    #allocation6 [shape = 's32[2]{0}', space=sflag, size = 0x8, scoped, tag = 'scoped memory for tpu_custom_call.1']
    #allocation7 [shape = 'u8[8192]{0}', space=vmem, size = 0x2000, scoped, tag = 'input window, operand 2, single buffered']
    #allocation8 [shape = 'u8[512]{0}', space=vmem, size = 0x400, scoped, tag = 'input window, operand 4, single buffered']
    #allocation9 [shape = 's32[1]{0}', space=sflag, size = 0x4, scoped, tag = 'scoped memory for tpu_custom_call.1']
    #allocation10 [shape = 'u8[512]{0}', space=vmem, size = 0x400, scoped, tag = 'input window, operand 5, single buffered']
    #allocation11 [shape = 'u8[1024]{0}', space=vmem, size = 0x400, scoped, tag = 'input window, operand 17']
    #allocation12 [shape = 's32[2]{0}', space=sflag, size = 0x8, scoped, tag = 'scoped memory for tpu_custom_call.1']
    #allocation13 [shape = 'u8[8192]{0}', space=vmem, size = 0x2000, scoped, tag = 'output window, operand 0']
    %23 = vsyncpa [#allocation3], 0
    %s24 = scalar_lea.sflag [#allocation3], 1
    %25 = vsyncpa %s24, 0
    %26 = vsyncpa [#allocation6], 0
    %s27 = scalar_lea.sflag [#allocation6], 1
    %28 = vsyncpa %s27, 0
    %29 = vsyncpa [#allocation9], 0
    %30 = vsyncpa [#allocation12], 0
    %s31 = scalar_lea.sflag [#allocation12], 1
    %32 = vsyncpa %s31, 0
    %33 = vsyncpa [#allocation4], 0
    %s34 = scalar_lea.sflag [#allocation4], 1
    %35 = vsyncpa %s34, 0
    loop: start=0, step=1, limit=6
    $region2: #{tpu_custom_call.1} parent=1 // loop_pre_header
      _
    $region3: #{tpu_custom_call.1} parent=1 // loop_header
      %s37 = sphi 0, %s41
      %p38 = scmp.ge.s32.totalorder %s37, 6
      %s44 = sphi 0, %s56
      %s45 = sphi 0, %s52
      %s46 = sphi 0, %s44
      %s47 = sphi 0, %s45
      %s48 = sphi 0, %s46
      %s49 = sphi 0, %s47
      %s59 = sphi 0, %s61
      %s62 = sphi 0, %s59
      %s63 = sphi 0, %s62
      %s79 = sphi 0, %s63
      %s85 = sphi 0, %s87
      %s88 = sphi 0, %s85
      %s89 = sphi 0, %s88
      %s105 = sphi 0, %s89
      %s109 = sphi 0, %s109
      %s111 = sphi 0, %s109
      %s112 = sphi 0, %s111
      %s126 = sphi 0, %s112
      %s130 = sphi 0, %s130
      %s132 = sphi 0, %s130
      %s133 = sphi 0, %s132
      %s147 = sphi 0, %s133
      %s151 = sphi 0, %s151
      %s153 = sphi 0, %s151
      %s154 = sphi 0, %s153
      %s168 = sphi 0, %s154
      %s172 = sphi 0, %s172
      %s174 = sphi 0, %s172
      %s175 = sphi 0, %s174
      %s189 = sphi 0, %s175
      %s195 = sphi 0, %s197
      %s198 = sphi 0, %s195
      %s199 = sphi 0, %s198
      %s215 = sphi 0, %s199
      %s221 = sphi 0, %s223
      %s224 = sphi 0, %s221
      %s225 = sphi 0, %s224
      %s241 = sphi 0, %s225
      %s247 = sphi 0, %s249
      %s250 = sphi 0, %s247
      %s251 = sphi 0, %s250
      %s267 = sphi 0, %s251
      %s273 = sphi 0, %s275
      %s276 = sphi 0, %s273
      %s277 = sphi 0, %s276
      %s293 = sphi 0, %s277
      %s299 = sphi 0, %s301
      %s302 = sphi 0, %s299
      %s303 = sphi 0, %s302
      %s319 = sphi 0, %s303
      %s325 = sphi 0, %s327
      %s328 = sphi 0, %s325
      %s329 = sphi 0, %s328
      %s345 = sphi 0, %s329
      %s351 = sphi 0, %s353
      %s354 = sphi 0, %s351
      %s355 = sphi 0, %s354
      %s371 = sphi 0, %s355
      %s377 = sphi 0, %s379
      %s380 = sphi 0, %s377
      %s381 = sphi 0, %s380
      %s397 = sphi 0, %s381
      %s403 = sphi 0, %s405
      %s406 = sphi 0, %s403
      %s407 = sphi 0, %s406
      %s423 = sphi 0, %s407
      %s429 = sphi 0, %s431
      %s432 = sphi 0, %s429
      %s433 = sphi 0, %s432
      %s449 = sphi 0, %s433
      %s455 = sphi 0, %s457
      %s458 = sphi 0, %s455
      %s459 = sphi 0, %s458
      %s475 = sphi 0, %s459
      %s481 = sphi 0, %s483
      %s484 = sphi 0, %s481
      %s485 = sphi 0, %s484
      %s501 = sphi 0, %s485
      %s507 = sphi 0, %s509
      %s510 = sphi 0, %s507
      %s511 = sphi 0, %s510
      %s527 = sphi 0, %s511
    $region4: #{tpu_custom_call.1} parent=1 // loop_header_branch
      %40 = sbr.rel (%p38) target = $region8
    $region5: #{tpu_custom_call.1} parent=1 // loop_body
      %s42 = ssub.s32 %s37, 1
      %s43 = ssub.s32 %s37, 2
      %s50 = sadd.s32 1, %s45
      %p51 = scmp.ge.s32.totalorder %s50, 2
      %s52 = scalar_select %p51, 0, %s50
      %s53 = sadd.s32 1, %s44
      %s54 = scalar_select %p51, %s53, %s44
      %p55 = scmp.ge.s32.totalorder %s54, 2
      %s56 = scalar_select %p55, 0, %s54
      %s57 = ssub.s32 %s44, %s56
      %p58 = scmp.eq.s32.totalorder %s57, 0
      %s60 = sadd.s32 %s59, 1
      %s61 = scalar_select %p58, %s59, %s60
      %p64 = pneg %p58
      %p65 = scmp.eq.s32.totalorder %s37, 3
      %p66 = por %p64, %p65
      %p67 = scmp.ne.s32.totalorder %s59, %s62
      %p68 = scmp.eq.s32.totalorder %s37, 0
      %p69 = por %p67, %p68
      %p70 = scmp.ne.s32.totalorder %s59, %s62
      %p71 = scmp.eq.s32.totalorder %s42, 3
      %p72 = por %p70, %p71
      %p73 = scmp.ne.s32.totalorder %s62, %s63
      %p74 = scmp.eq.s32.totalorder %s42, 0
      %p75 = por %p73, %p74
      %p76 = scmp.ne.s32.totalorder %s62, %s63
      %p77 = scmp.eq.s32.totalorder %s43, 3
      %p78 = por %p76, %p77
      %p80 = scmp.ne.s32.totalorder %s63, %s79
      %p81 = scmp.eq.s32.totalorder %s43, 0
      %p82 = por %p80, %p81
      %s83 = ssub.s32 %s44, %s56
      %p84 = scmp.eq.s32.totalorder %s83, 0
      %s86 = sadd.s32 %s85, 1
      %s87 = scalar_select %p84, %s85, %s86
      %p90 = pneg %p84
      %p91 = scmp.eq.s32.totalorder %s37, 3
      %p92 = por %p90, %p91
      %p93 = scmp.ne.s32.totalorder %s85, %s88
      %p94 = scmp.eq.s32.totalorder %s37, 0
      %p95 = por %p93, %p94
      %p96 = scmp.ne.s32.totalorder %s85, %s88
      %p97 = scmp.eq.s32.totalorder %s42, 3
      %p98 = por %p96, %p97
      %p99 = scmp.ne.s32.totalorder %s88, %s89
      %p100 = scmp.eq.s32.totalorder %s42, 0
      %p101 = por %p99, %p100
      %p102 = scmp.ne.s32.totalorder %s88, %s89
      %p103 = scmp.eq.s32.totalorder %s43, 3
      %p104 = por %p102, %p103
      %p106 = scmp.ne.s32.totalorder %s89, %s105
      %p107 = scmp.eq.s32.totalorder %s43, 0
      %p108 = por %p106, %p107
      %s110 = sadd.s32 %s109, 1
      %p113 = scmp.eq.s32.totalorder %s37, 3
      %p114 = scmp.ne.s32.totalorder %s109, %s111
      %p115 = scmp.eq.s32.totalorder %s37, 0
      %p116 = por %p114, %p115
      %p117 = scmp.ne.s32.totalorder %s109, %s111
      %p118 = scmp.eq.s32.totalorder %s42, 3
      %p119 = por %p117, %p118
      %p120 = scmp.ne.s32.totalorder %s111, %s112
      %p121 = scmp.eq.s32.totalorder %s42, 0
      %p122 = por %p120, %p121
      %p123 = scmp.ne.s32.totalorder %s111, %s112
      %p124 = scmp.eq.s32.totalorder %s43, 3
      %p125 = por %p123, %p124
      %p127 = scmp.ne.s32.totalorder %s112, %s126
      %p128 = scmp.eq.s32.totalorder %s43, 0
      %p129 = por %p127, %p128
      %s131 = sadd.s32 %s130, 1
      %p134 = scmp.eq.s32.totalorder %s37, 3
      %p135 = scmp.ne.s32.totalorder %s130, %s132
      %p136 = scmp.eq.s32.totalorder %s37, 0
      %p137 = por %p135, %p136
      %p138 = scmp.ne.s32.totalorder %s130, %s132
      %p139 = scmp.eq.s32.totalorder %s42, 3
      %p140 = por %p138, %p139
      %p141 = scmp.ne.s32.totalorder %s132, %s133
      %p142 = scmp.eq.s32.totalorder %s42, 0
      %p143 = por %p141, %p142
      %p144 = scmp.ne.s32.totalorder %s132, %s133
      %p145 = scmp.eq.s32.totalorder %s43, 3
      %p146 = por %p144, %p145
      %p148 = scmp.ne.s32.totalorder %s133, %s147
      %p149 = scmp.eq.s32.totalorder %s43, 0
      %p150 = por %p148, %p149
      %s152 = sadd.s32 %s151, 1
      %p155 = scmp.eq.s32.totalorder %s37, 3
      %p156 = scmp.ne.s32.totalorder %s151, %s153
      %p157 = scmp.eq.s32.totalorder %s37, 0
      %p158 = por %p156, %p157
      %p159 = scmp.ne.s32.totalorder %s151, %s153
      %p160 = scmp.eq.s32.totalorder %s42, 3
      %p161 = por %p159, %p160
      %p162 = scmp.ne.s32.totalorder %s153, %s154
      %p163 = scmp.eq.s32.totalorder %s42, 0
      %p164 = por %p162, %p163
      %p165 = scmp.ne.s32.totalorder %s153, %s154
      %p166 = scmp.eq.s32.totalorder %s43, 3
      %p167 = por %p165, %p166
      %p169 = scmp.ne.s32.totalorder %s154, %s168
      %p170 = scmp.eq.s32.totalorder %s43, 0
      %p171 = por %p169, %p170
      %s173 = sadd.s32 %s172, 1
      %p176 = scmp.eq.s32.totalorder %s37, 3
      %p177 = scmp.ne.s32.totalorder %s172, %s174
      %p178 = scmp.eq.s32.totalorder %s37, 0
      %p179 = por %p177, %p178
      %p180 = scmp.ne.s32.totalorder %s172, %s174
      %p181 = scmp.eq.s32.totalorder %s42, 3
      %p182 = por %p180, %p181
      %p183 = scmp.ne.s32.totalorder %s174, %s175
      %p184 = scmp.eq.s32.totalorder %s42, 0
      %p185 = por %p183, %p184
      %p186 = scmp.ne.s32.totalorder %s174, %s175
      %p187 = scmp.eq.s32.totalorder %s43, 3
      %p188 = por %p186, %p187
      %p190 = scmp.ne.s32.totalorder %s175, %s189
      %p191 = scmp.eq.s32.totalorder %s43, 0
      %p192 = por %p190, %p191
      %s193 = ssub.s32 %s45, %s52
      %p194 = scmp.eq.s32.totalorder %s193, 0
      %s196 = sadd.s32 %s195, 1
      %s197 = scalar_select %p194, %s195, %s196
      %p200 = pneg %p194
      %p201 = scmp.eq.s32.totalorder %s37, 3
      %p202 = por %p200, %p201
      %p203 = scmp.ne.s32.totalorder %s195, %s198
      %p204 = scmp.eq.s32.totalorder %s37, 0
      %p205 = por %p203, %p204
      %p206 = scmp.ne.s32.totalorder %s195, %s198
      %p207 = scmp.eq.s32.totalorder %s42, 3
      %p208 = por %p206, %p207
      %p209 = scmp.ne.s32.totalorder %s198, %s199
      %p210 = scmp.eq.s32.totalorder %s42, 0
      %p211 = por %p209, %p210
      %p212 = scmp.ne.s32.totalorder %s198, %s199
      %p213 = scmp.eq.s32.totalorder %s43, 3
      %p214 = por %p212, %p213
      %p216 = scmp.ne.s32.totalorder %s199, %s215
      %p217 = scmp.eq.s32.totalorder %s43, 0
      %p218 = por %p216, %p217
      %s219 = ssub.s32 %s45, %s52
      %p220 = scmp.eq.s32.totalorder %s219, 0
      %s222 = sadd.s32 %s221, 1
      %s223 = scalar_select %p220, %s221, %s222
      %p226 = pneg %p220
      %p227 = scmp.eq.s32.totalorder %s37, 3
      %p228 = por %p226, %p227
      %p229 = scmp.ne.s32.totalorder %s221, %s224
      %p230 = scmp.eq.s32.totalorder %s37, 0
      %p231 = por %p229, %p230
      %p232 = scmp.ne.s32.totalorder %s221, %s224
      %p233 = scmp.eq.s32.totalorder %s42, 3
      %p234 = por %p232, %p233
      %p235 = scmp.ne.s32.totalorder %s224, %s225
      %p236 = scmp.eq.s32.totalorder %s42, 0
      %p237 = por %p235, %p236
      %p238 = scmp.ne.s32.totalorder %s224, %s225
      %p239 = scmp.eq.s32.totalorder %s43, 3
      %p240 = por %p238, %p239
      %p242 = scmp.ne.s32.totalorder %s225, %s241
      %p243 = scmp.eq.s32.totalorder %s43, 0
      %p244 = por %p242, %p243
      %s245 = ssub.s32 %s45, %s52
      %p246 = scmp.eq.s32.totalorder %s245, 0
      %s248 = sadd.s32 %s247, 1
      %s249 = scalar_select %p246, %s247, %s248
      %p252 = pneg %p246
      %p253 = scmp.eq.s32.totalorder %s37, 3
      %p254 = por %p252, %p253
      %p255 = scmp.ne.s32.totalorder %s247, %s250
      %p256 = scmp.eq.s32.totalorder %s37, 0
      %p257 = por %p255, %p256
      %p258 = scmp.ne.s32.totalorder %s247, %s250
      %p259 = scmp.eq.s32.totalorder %s42, 3
      %p260 = por %p258, %p259
      %p261 = scmp.ne.s32.totalorder %s250, %s251
      %p262 = scmp.eq.s32.totalorder %s42, 0
      %p263 = por %p261, %p262
      %p264 = scmp.ne.s32.totalorder %s250, %s251
      %p265 = scmp.eq.s32.totalorder %s43, 3
      %p266 = por %p264, %p265
      %p268 = scmp.ne.s32.totalorder %s251, %s267
      %p269 = scmp.eq.s32.totalorder %s43, 0
      %p270 = por %p268, %p269
      %s271 = ssub.s32 %s45, %s52
      %p272 = scmp.eq.s32.totalorder %s271, 0
      %s274 = sadd.s32 %s273, 1
      %s275 = scalar_select %p272, %s273, %s274
      %p278 = pneg %p272
      %p279 = scmp.eq.s32.totalorder %s37, 3
      %p280 = por %p278, %p279
      %p281 = scmp.ne.s32.totalorder %s273, %s276
      %p282 = scmp.eq.s32.totalorder %s37, 0
      %p283 = por %p281, %p282
      %p284 = scmp.ne.s32.totalorder %s273, %s276
      %p285 = scmp.eq.s32.totalorder %s42, 3
      %p286 = por %p284, %p285
      %p287 = scmp.ne.s32.totalorder %s276, %s277
      %p288 = scmp.eq.s32.totalorder %s42, 0
      %p289 = por %p287, %p288
      %p290 = scmp.ne.s32.totalorder %s276, %s277
      %p291 = scmp.eq.s32.totalorder %s43, 3
      %p292 = por %p290, %p291
      %p294 = scmp.ne.s32.totalorder %s277, %s293
      %p295 = scmp.eq.s32.totalorder %s43, 0
      %p296 = por %p294, %p295
      %s297 = ssub.s32 %s45, %s52
      %p298 = scmp.eq.s32.totalorder %s297, 0
      %s300 = sadd.s32 %s299, 1
      %s301 = scalar_select %p298, %s299, %s300
      %p304 = pneg %p298
      %p305 = scmp.eq.s32.totalorder %s37, 3
      %p306 = por %p304, %p305
      %p307 = scmp.ne.s32.totalorder %s299, %s302
      %p308 = scmp.eq.s32.totalorder %s37, 0
      %p309 = por %p307, %p308
      %p310 = scmp.ne.s32.totalorder %s299, %s302
      %p311 = scmp.eq.s32.totalorder %s42, 3
      %p312 = por %p310, %p311
      %p313 = scmp.ne.s32.totalorder %s302, %s303
      %p314 = scmp.eq.s32.totalorder %s42, 0
      %p315 = por %p313, %p314
      %p316 = scmp.ne.s32.totalorder %s302, %s303
      %p317 = scmp.eq.s32.totalorder %s43, 3
      %p318 = por %p316, %p317
      %p320 = scmp.ne.s32.totalorder %s303, %s319
      %p321 = scmp.eq.s32.totalorder %s43, 0
      %p322 = por %p320, %p321
      %s323 = ssub.s32 %s45, %s52
      %p324 = scmp.eq.s32.totalorder %s323, 0
      %s326 = sadd.s32 %s325, 1
      %s327 = scalar_select %p324, %s325, %s326
      %p330 = pneg %p324
      %p331 = scmp.eq.s32.totalorder %s37, 3
      %p332 = por %p330, %p331
      %p333 = scmp.ne.s32.totalorder %s325, %s328
      %p334 = scmp.eq.s32.totalorder %s37, 0
      %p335 = por %p333, %p334
      %p336 = scmp.ne.s32.totalorder %s325, %s328
      %p337 = scmp.eq.s32.totalorder %s42, 3
      %p338 = por %p336, %p337
      %p339 = scmp.ne.s32.totalorder %s328, %s329
      %p340 = scmp.eq.s32.totalorder %s42, 0
      %p341 = por %p339, %p340
      %p342 = scmp.ne.s32.totalorder %s328, %s329
      %p343 = scmp.eq.s32.totalorder %s43, 3
      %p344 = por %p342, %p343
      %p346 = scmp.ne.s32.totalorder %s329, %s345
      %p347 = scmp.eq.s32.totalorder %s43, 0
      %p348 = por %p346, %p347
      %s349 = ssub.s32 %s45, %s52
      %p350 = scmp.eq.s32.totalorder %s349, 0
      %s352 = sadd.s32 %s351, 1
      %s353 = scalar_select %p350, %s351, %s352
      %p356 = pneg %p350
      %p357 = scmp.eq.s32.totalorder %s37, 3
      %p358 = por %p356, %p357
      %p359 = scmp.ne.s32.totalorder %s351, %s354
      %p360 = scmp.eq.s32.totalorder %s37, 0
      %p361 = por %p359, %p360
      %p362 = scmp.ne.s32.totalorder %s351, %s354
      %p363 = scmp.eq.s32.totalorder %s42, 3
      %p364 = por %p362, %p363
      %p365 = scmp.ne.s32.totalorder %s354, %s355
      %p366 = scmp.eq.s32.totalorder %s42, 0
      %p367 = por %p365, %p366
      %p368 = scmp.ne.s32.totalorder %s354, %s355
      %p369 = scmp.eq.s32.totalorder %s43, 3
      %p370 = por %p368, %p369
      %p372 = scmp.ne.s32.totalorder %s355, %s371
      %p373 = scmp.eq.s32.totalorder %s43, 0
      %p374 = por %p372, %p373
      %s375 = ssub.s32 %s45, %s52
      %p376 = scmp.eq.s32.totalorder %s375, 0
      %s378 = sadd.s32 %s377, 1
      %s379 = scalar_select %p376, %s377, %s378
      %p382 = pneg %p376
      %p383 = scmp.eq.s32.totalorder %s37, 3
      %p384 = por %p382, %p383
      %p385 = scmp.ne.s32.totalorder %s377, %s380
      %p386 = scmp.eq.s32.totalorder %s37, 0
      %p387 = por %p385, %p386
      %p388 = scmp.ne.s32.totalorder %s377, %s380
      %p389 = scmp.eq.s32.totalorder %s42, 3
      %p390 = por %p388, %p389
      %p391 = scmp.ne.s32.totalorder %s380, %s381
      %p392 = scmp.eq.s32.totalorder %s42, 0
      %p393 = por %p391, %p392
      %p394 = scmp.ne.s32.totalorder %s380, %s381
      %p395 = scmp.eq.s32.totalorder %s43, 3
      %p396 = por %p394, %p395
      %p398 = scmp.ne.s32.totalorder %s381, %s397
      %p399 = scmp.eq.s32.totalorder %s43, 0
      %p400 = por %p398, %p399
      %s401 = ssub.s32 %s45, %s52
      %p402 = scmp.eq.s32.totalorder %s401, 0
      %s404 = sadd.s32 %s403, 1
      %s405 = scalar_select %p402, %s403, %s404
      %p408 = pneg %p402
      %p409 = scmp.eq.s32.totalorder %s37, 3
      %p410 = por %p408, %p409
      %p411 = scmp.ne.s32.totalorder %s403, %s406
      %p412 = scmp.eq.s32.totalorder %s37, 0
      %p413 = por %p411, %p412
      %p414 = scmp.ne.s32.totalorder %s403, %s406
      %p415 = scmp.eq.s32.totalorder %s42, 3
      %p416 = por %p414, %p415
      %p417 = scmp.ne.s32.totalorder %s406, %s407
      %p418 = scmp.eq.s32.totalorder %s42, 0
      %p419 = por %p417, %p418
      %p420 = scmp.ne.s32.totalorder %s406, %s407
      %p421 = scmp.eq.s32.totalorder %s43, 3
      %p422 = por %p420, %p421
      %p424 = scmp.ne.s32.totalorder %s407, %s423
      %p425 = scmp.eq.s32.totalorder %s43, 0
      %p426 = por %p424, %p425
      %s427 = ssub.s32 %s45, %s52
      %p428 = scmp.eq.s32.totalorder %s427, 0
      %s430 = sadd.s32 %s429, 1
      %s431 = scalar_select %p428, %s429, %s430
      %p434 = pneg %p428
      %p435 = scmp.eq.s32.totalorder %s37, 3
      %p436 = por %p434, %p435
      %p437 = scmp.ne.s32.totalorder %s429, %s432
      %p438 = scmp.eq.s32.totalorder %s37, 0
      %p439 = por %p437, %p438
      %p440 = scmp.ne.s32.totalorder %s429, %s432
      %p441 = scmp.eq.s32.totalorder %s42, 3
      %p442 = por %p440, %p441
      %p443 = scmp.ne.s32.totalorder %s432, %s433
      %p444 = scmp.eq.s32.totalorder %s42, 0
      %p445 = por %p443, %p444
      %p446 = scmp.ne.s32.totalorder %s432, %s433
      %p447 = scmp.eq.s32.totalorder %s43, 3
      %p448 = por %p446, %p447
      %p450 = scmp.ne.s32.totalorder %s433, %s449
      %p451 = scmp.eq.s32.totalorder %s43, 0
      %p452 = por %p450, %p451
      %s453 = ssub.s32 %s45, %s52
      %p454 = scmp.eq.s32.totalorder %s453, 0
      %s456 = sadd.s32 %s455, 1
      %s457 = scalar_select %p454, %s455, %s456
      %p460 = pneg %p454
      %p461 = scmp.eq.s32.totalorder %s37, 3
      %p462 = por %p460, %p461
      %p463 = scmp.ne.s32.totalorder %s455, %s458
      %p464 = scmp.eq.s32.totalorder %s37, 0
      %p465 = por %p463, %p464
      %p466 = scmp.ne.s32.totalorder %s455, %s458
      %p467 = scmp.eq.s32.totalorder %s42, 3
      %p468 = por %p466, %p467
      %p469 = scmp.ne.s32.totalorder %s458, %s459
      %p470 = scmp.eq.s32.totalorder %s42, 0
      %p471 = por %p469, %p470
      %p472 = scmp.ne.s32.totalorder %s458, %s459
      %p473 = scmp.eq.s32.totalorder %s43, 3
      %p474 = por %p472, %p473
      %p476 = scmp.ne.s32.totalorder %s459, %s475
      %p477 = scmp.eq.s32.totalorder %s43, 0
      %p478 = por %p476, %p477
      %s479 = ssub.s32 %s45, %s52
      %p480 = scmp.eq.s32.totalorder %s479, 0
      %s482 = sadd.s32 %s481, 1
      %s483 = scalar_select %p480, %s481, %s482
      %p486 = pneg %p480
      %p487 = scmp.eq.s32.totalorder %s37, 3
      %p488 = por %p486, %p487
      %p489 = scmp.ne.s32.totalorder %s481, %s484
      %p490 = scmp.eq.s32.totalorder %s37, 0
      %p491 = por %p489, %p490
      %p492 = scmp.ne.s32.totalorder %s481, %s484
      %p493 = scmp.eq.s32.totalorder %s42, 3
      %p494 = por %p492, %p493
      %p495 = scmp.ne.s32.totalorder %s484, %s485
      %p496 = scmp.eq.s32.totalorder %s42, 0
      %p497 = por %p495, %p496
      %p498 = scmp.ne.s32.totalorder %s484, %s485
      %p499 = scmp.eq.s32.totalorder %s43, 3
      %p500 = por %p498, %p499
      %p502 = scmp.ne.s32.totalorder %s485, %s501
      %p503 = scmp.eq.s32.totalorder %s43, 0
      %p504 = por %p502, %p503
      %s505 = ssub.s32 %s44, %s56
      %p506 = scmp.eq.s32.totalorder %s505, 0
      %s508 = sadd.s32 %s507, 1
      %s509 = scalar_select %p506, %s507, %s508
      %p512 = pneg %p506
      %p513 = scmp.eq.s32.totalorder %s37, 3
      %p514 = por %p512, %p513
      %p515 = scmp.ne.s32.totalorder %s507, %s510
      %p516 = scmp.eq.s32.totalorder %s37, 0
      %p517 = por %p515, %p516
      %p518 = scmp.ne.s32.totalorder %s507, %s510
      %p519 = scmp.eq.s32.totalorder %s42, 3
      %p520 = por %p518, %p519
      %p521 = scmp.ne.s32.totalorder %s510, %s511
      %p522 = scmp.eq.s32.totalorder %s42, 0
      %p523 = por %p521, %p522
      %p524 = scmp.ne.s32.totalorder %s510, %s511
      %p525 = scmp.eq.s32.totalorder %s43, 3
      %p526 = por %p524, %p525
      %p528 = scmp.ne.s32.totalorder %s511, %s527
      %p529 = scmp.eq.s32.totalorder %s43, 0
      %p530 = por %p528, %p529
      %p531 = scmp.le.s32.totalorder 1, %s37
      %p532 = scmp.lt.s32.totalorder %s37, 5
      %p533 = pnand %p531, %p532
      %p534 = pneg %p533
      // Predicated region
      $region9: #{tpu_custom_call.1} parent=5 // pred_check
        _
      $region10: #{tpu_custom_call.1} parent=5 // pred_check_branch
        %536 = sbr.rel (%p533) target = $region12
      $region11: #{tpu_custom_call.1} parent=5 // pred_region
        %s537 = ssub.s32 %s37, 1
        // Predicated region
        $region13: #{tpu_custom_call.1} parent=11 // pred_check
          %p538 = pneg %p122
        $region14: #{tpu_custom_call.1} parent=11 // pred_check_branch
          %540 = sbr.rel (%p538) target = $region16
        $region15: #{tpu_custom_call.1} parent=11 // pred_region
          %542 = vsyncadd [#allocation6], 0
          %s543 = sshll.u32 %s2, 4
          %s544 = int_to_ptr.hbm [resolvable:$true] %s543
          %s545 = sshll.u32 [#allocation7], 4
          %s546 = int_to_ptr.vmem [resolvable:$true] %s545
          %551 = dma.hbm_to_vmem [thread:$0]  %s544, 256, %s546, [#allocation6], 64, 64, 4
        $region16: #{tpu_custom_call.1} parent=11 // pred_fallthru
          _
        // Predicated region
        $region17: #{tpu_custom_call.1} parent=11 // pred_check
          %p552 = pneg %p143
        $region18: #{tpu_custom_call.1} parent=11 // pred_check_branch
          %554 = sbr.rel (%p552) target = $region20
        $region19: #{tpu_custom_call.1} parent=11 // pred_region
          _
        $region20: #{tpu_custom_call.1} parent=11 // pred_fallthru
          _
        // Predicated region
        $region21: #{tpu_custom_call.1} parent=11 // pred_check
          %p555 = pneg %p164
        $region22: #{tpu_custom_call.1} parent=11 // pred_check_branch
          %557 = sbr.rel (%p555) target = $region24
        $region23: #{tpu_custom_call.1} parent=11 // pred_region
          %559 = vsyncadd [#allocation9], 0
          %s561 = sshll.u32 %s4, 4
          %s562 = int_to_ptr.hbm [resolvable:$true] %s561
          %s563 = sshll.u32 [#allocation8], 4
          %s564 = int_to_ptr.vmem [resolvable:$true] %s563
          %566 = dma.hbm_to_vmem [thread:$0]  %s562, 16, %s564, [#allocation9]
        $region24: #{tpu_custom_call.1} parent=11 // pred_fallthru
          _
        // Predicated region
        $region25: #{tpu_custom_call.1} parent=11 // pred_check
          %p567 = pneg %p185
        $region26: #{tpu_custom_call.1} parent=11 // pred_check_branch
          %569 = sbr.rel (%p567) target = $region28
        $region27: #{tpu_custom_call.1} parent=11 // pred_region
          %571 = vsyncadd [#allocation9], 0
          %s573 = sshll.u32 %s5, 4
          %s574 = int_to_ptr.hbm [resolvable:$true] %s573
          %s575 = sshll.u32 [#allocation10], 4
          %s576 = int_to_ptr.vmem [resolvable:$true] %s575
          %578 = dma.hbm_to_vmem [thread:$0]  %s574, 16, %s576, [#allocation9]
        $region28: #{tpu_custom_call.1} parent=11 // pred_fallthru
          _
      $region12: #{tpu_custom_call.1} parent=5 // pred_fallthru
        _
      %p579 = scmp.lt.s32.totalorder %s37, 4
      // Predicated region
      $region29: #{tpu_custom_call.1} parent=5 // pred_check
        %p580 = pneg %p579
      $region30: #{tpu_custom_call.1} parent=5 // pred_check_branch
        %582 = sbr.rel (%p580) target = $region32
      $region31: #{tpu_custom_call.1} parent=5 // pred_region
        // Predicated region
        $region33: #{tpu_custom_call.1} parent=31 // pred_check
          %p583 = pneg %p69
        $region34: #{tpu_custom_call.1} parent=31 // pred_check_branch
          %585 = sbr.rel (%p583) target = $region36
        $region35: #{tpu_custom_call.1} parent=31 // pred_region
          %s586 = sand.u32 %s59, 1
          %s587 = scalar_lea.sflag [#allocation3], %s586
          %s588 = sand.u32 %s59, 1
          %s589 = smul.addr %s588, 8
          %s590 = scalar_lea.vmem [#allocation2], %s589
          %592 = vsyncadd %s587, 0
          %s593 = smul.addr %s44, 8
          %s594 = scalar_lea.hbm %s0, %s593
          %s596 = sshll.u32 %s594, 4
          %s597 = int_to_ptr.hbm [resolvable:$true] %s596
          %s598 = sshll.u32 %s590, 4
          %s599 = int_to_ptr.vmem [resolvable:$true] %s598
          %601 = dma.hbm_to_vmem [thread:$0]  %s597, 128, %s599, %s587
        $region36: #{tpu_custom_call.1} parent=31 // pred_fallthru
          _
        // Predicated region
        $region37: #{tpu_custom_call.1} parent=31 // pred_check
          %p602 = pneg %p95
        $region38: #{tpu_custom_call.1} parent=31 // pred_check_branch
          %604 = sbr.rel (%p602) target = $region40
        $region39: #{tpu_custom_call.1} parent=31 // pred_region
          %s605 = sand.u32 %s37, 1
          %s606 = scalar_lea.sflag [#allocation6], %s605
          %s607 = sand.u32 %s85, 1
          %s608 = scalar_lea.vmem [#allocation5], %s607
          %610 = vsyncadd %s606, 0
          %s611 = scalar_lea.hbm %s1, %s44
          %s613 = sshll.u32 %s611, 4
          %s614 = int_to_ptr.hbm [resolvable:$true] %s613
          %s615 = sshll.u32 %s608, 4
          %s616 = int_to_ptr.vmem [resolvable:$true] %s615
          %618 = dma.hbm_to_vmem [thread:$0]  %s614, 16, %s616, %s606
        $region40: #{tpu_custom_call.1} parent=31 // pred_fallthru
          _
        // Predicated region
        $region41: #{tpu_custom_call.1} parent=31 // pred_check
          %p619 = pneg %p205
        $region42: #{tpu_custom_call.1} parent=31 // pred_check_branch
          %621 = sbr.rel (%p619) target = $region44
        $region43: #{tpu_custom_call.1} parent=31 // pred_region
          %p622 = scmp.lt.s32.totalorder %s45, 1
          %s623 = scalar_select %p622, %s45, 1
          %s624 = smul.addr %s623, 4
          %s625 = smul.addr %s624, 4
          %s626 = scalar_lea.vmem %s6, %s625
        $region44: #{tpu_custom_call.1} parent=31 // pred_fallthru
          _
        // Predicated region
        $region45: #{tpu_custom_call.1} parent=31 // pred_check
          %p627 = pneg %p231
        $region46: #{tpu_custom_call.1} parent=31 // pred_check_branch
          %629 = sbr.rel (%p627) target = $region48
        $region47: #{tpu_custom_call.1} parent=31 // pred_region
          %p630 = scmp.lt.s32.totalorder %s45, 1
          %s631 = scalar_select %p630, %s45, 1
          %s632 = scalar_lea.vmem %s7, %s631
        $region48: #{tpu_custom_call.1} parent=31 // pred_fallthru
          _
        // Predicated region
        $region49: #{tpu_custom_call.1} parent=31 // pred_check
          %p633 = pneg %p257
        $region50: #{tpu_custom_call.1} parent=31 // pred_check_branch
          %635 = sbr.rel (%p633) target = $region52
        $region51: #{tpu_custom_call.1} parent=31 // pred_region
          %p636 = scmp.lt.s32.totalorder %s45, 1
          %s637 = scalar_select %p636, %s45, 1
          %s638 = smul.addr %s637, 4
          %s639 = smul.addr %s638, 4
          %s640 = scalar_lea.vmem %s8, %s639
        $region52: #{tpu_custom_call.1} parent=31 // pred_fallthru
          _
        // Predicated region
        $region53: #{tpu_custom_call.1} parent=31 // pred_check
          %p641 = pneg %p283
        $region54: #{tpu_custom_call.1} parent=31 // pred_check_branch
          %643 = sbr.rel (%p641) target = $region56
        $region55: #{tpu_custom_call.1} parent=31 // pred_region
          %p644 = scmp.lt.s32.totalorder %s45, 1
          %s645 = scalar_select %p644, %s45, 1
          %s646 = scalar_lea.vmem %s9, %s645
        $region56: #{tpu_custom_call.1} parent=31 // pred_fallthru
          _
        // Predicated region
        $region57: #{tpu_custom_call.1} parent=31 // pred_check
          %p647 = pneg %p309
        $region58: #{tpu_custom_call.1} parent=31 // pred_check_branch
          %649 = sbr.rel (%p647) target = $region60
        $region59: #{tpu_custom_call.1} parent=31 // pred_region
          %p650 = scmp.lt.s32.totalorder %s45, 1
          %s651 = scalar_select %p650, %s45, 1
          %s652 = scalar_lea.vmem %s10, %s651
        $region60: #{tpu_custom_call.1} parent=31 // pred_fallthru
          _
        // Predicated region
        $region61: #{tpu_custom_call.1} parent=31 // pred_check
          %p653 = pneg %p335
        $region62: #{tpu_custom_call.1} parent=31 // pred_check_branch
          %655 = sbr.rel (%p653) target = $region64
        $region63: #{tpu_custom_call.1} parent=31 // pred_region
          %p656 = scmp.lt.s32.totalorder %s45, 1
          %s657 = scalar_select %p656, %s45, 1
          %s658 = scalar_lea.vmem %s11, %s657
        $region64: #{tpu_custom_call.1} parent=31 // pred_fallthru
          _
        // Predicated region
        $region65: #{tpu_custom_call.1} parent=31 // pred_check
          %p659 = pneg %p361
        $region66: #{tpu_custom_call.1} parent=31 // pred_check_branch
          %661 = sbr.rel (%p659) target = $region68
        $region67: #{tpu_custom_call.1} parent=31 // pred_region
          %p662 = scmp.lt.s32.totalorder %s45, 1
          %s663 = scalar_select %p662, %s45, 1
          %s664 = smul.addr %s663, 4
          %s665 = smul.addr %s664, 4
          %s666 = scalar_lea.vmem %s12, %s665
        $region68: #{tpu_custom_call.1} parent=31 // pred_fallthru
          _
        // Predicated region
        $region69: #{tpu_custom_call.1} parent=31 // pred_check
          %p667 = pneg %p387
        $region70: #{tpu_custom_call.1} parent=31 // pred_check_branch
          %669 = sbr.rel (%p667) target = $region72
        $region71: #{tpu_custom_call.1} parent=31 // pred_region
          %p670 = scmp.lt.s32.totalorder %s45, 1
          %s671 = scalar_select %p670, %s45, 1
          %s672 = scalar_lea.vmem %s13, %s671
        $region72: #{tpu_custom_call.1} parent=31 // pred_fallthru
          _
        // Predicated region
        $region73: #{tpu_custom_call.1} parent=31 // pred_check
          %p673 = pneg %p413
        $region74: #{tpu_custom_call.1} parent=31 // pred_check_branch
          %675 = sbr.rel (%p673) target = $region76
        $region75: #{tpu_custom_call.1} parent=31 // pred_region
          %p676 = scmp.lt.s32.totalorder %s45, 1
          %s677 = scalar_select %p676, %s45, 1
          %s678 = smul.addr %s677, 8
          %s679 = smul.addr %s678, 4
          %s680 = scalar_lea.vmem %s14, %s679
        $region76: #{tpu_custom_call.1} parent=31 // pred_fallthru
          _
        // Predicated region
        $region77: #{tpu_custom_call.1} parent=31 // pred_check
          %p681 = pneg %p439
        $region78: #{tpu_custom_call.1} parent=31 // pred_check_branch
          %683 = sbr.rel (%p681) target = $region80
        $region79: #{tpu_custom_call.1} parent=31 // pred_region
          %p684 = scmp.lt.s32.totalorder %s45, 1
          %s685 = scalar_select %p684, %s45, 1
          %s686 = scalar_lea.vmem %s15, %s685
        $region80: #{tpu_custom_call.1} parent=31 // pred_fallthru
          _
        // Predicated region
        $region81: #{tpu_custom_call.1} parent=31 // pred_check
          %p687 = pneg %p465
        $region82: #{tpu_custom_call.1} parent=31 // pred_check_branch
          %689 = sbr.rel (%p687) target = $region84
        $region83: #{tpu_custom_call.1} parent=31 // pred_region
          %p690 = scmp.lt.s32.totalorder %s45, 1
          %s691 = scalar_select %p690, %s45, 1
          %s692 = scalar_lea.vmem %s16, %s691
        $region84: #{tpu_custom_call.1} parent=31 // pred_fallthru
          _
        // Predicated region
        $region85: #{tpu_custom_call.1} parent=31 // pred_check
          %p693 = pneg %p491
        $region86: #{tpu_custom_call.1} parent=31 // pred_check_branch
          %695 = sbr.rel (%p693) target = $region88
        $region87: #{tpu_custom_call.1} parent=31 // pred_region
          %s696 = sand.u32 %s481, 1
          %s697 = scalar_lea.sflag [#allocation12], %s696
          %s698 = sand.u32 %s481, 1
          %s699 = scalar_lea.vmem [#allocation11], %s698
          %701 = vsyncadd %s697, 0
          %s702 = scalar_lea.hbm %s17, %s45
          %s704 = sshll.u32 %s702, 4
          %s705 = int_to_ptr.hbm [resolvable:$true] %s704
          %s706 = sshll.u32 %s699, 4
          %s707 = int_to_ptr.vmem [resolvable:$true] %s706
          %709 = dma.hbm_to_vmem [thread:$0]  %s705, 16, %s707, %s697
        $region88: #{tpu_custom_call.1} parent=31 // pred_fallthru
          _
      $region32: #{tpu_custom_call.1} parent=5 // pred_fallthru
        _
      %p710 = scmp.le.s32.totalorder 1, %s37
      %p711 = scmp.lt.s32.totalorder %s37, 5
      %p712 = pnand %p710, %p711
      %p713 = pneg %p712
      // Predicated region
      $region89: #{tpu_custom_call.1} parent=5 // pred_check
        _
      $region90: #{tpu_custom_call.1} parent=5 // pred_check_branch
        %715 = sbr.rel (%p712) target = $region92
      $region91: #{tpu_custom_call.1} parent=5 // pred_region
        %s716 = ssub.s32 %s37, 1
        %s717 = sand.u32 %s62, 1
        %s718 = scalar_lea.sflag [#allocation3], %s717
        %s719 = sand.u32 %s62, 1
        %s720 = smul.addr %s719, 8
        %s721 = scalar_lea.vmem [#allocation2], %s720
        // Predicated region
        $region93: #{tpu_custom_call.1} parent=91 // pred_check
          %p722 = pneg %p75
        $region94: #{tpu_custom_call.1} parent=91 // pred_check_branch
          %724 = sbr.rel (%p722) target = $region96
        $region95: #{tpu_custom_call.1} parent=91 // pred_region
          %726 = dma.done %s718, 128
        $region96: #{tpu_custom_call.1} parent=91 // pred_fallthru
          _
        %s727 = sand.u32 %s42, 1
        %s728 = scalar_lea.sflag [#allocation6], %s727
        %s729 = sand.u32 %s88, 1
        %s730 = scalar_lea.vmem [#allocation5], %s729
        // Predicated region
        $region97: #{tpu_custom_call.1} parent=91 // pred_check
          %p731 = pneg %p101
        $region98: #{tpu_custom_call.1} parent=91 // pred_check_branch
          %733 = sbr.rel (%p731) target = $region100
        $region99: #{tpu_custom_call.1} parent=91 // pred_region
          %735 = dma.done %s728, 16
        $region100: #{tpu_custom_call.1} parent=91 // pred_fallthru
          _
        // Predicated region
        $region101: #{tpu_custom_call.1} parent=91 // pred_check
          %p736 = pneg %p122
        $region102: #{tpu_custom_call.1} parent=91 // pred_check_branch
          %738 = sbr.rel (%p736) target = $region104
        $region103: #{tpu_custom_call.1} parent=91 // pred_region
          %740 = dma.done [#allocation6], 256
        $region104: #{tpu_custom_call.1} parent=91 // pred_fallthru
          _
        // Predicated region
        $region105: #{tpu_custom_call.1} parent=91 // pred_check
          %p741 = pneg %p164
        $region106: #{tpu_custom_call.1} parent=91 // pred_check_branch
          %743 = sbr.rel (%p741) target = $region108
        $region107: #{tpu_custom_call.1} parent=91 // pred_region
          %745 = dma.done [#allocation9], 16
        $region108: #{tpu_custom_call.1} parent=91 // pred_fallthru
          _
        // Predicated region
        $region109: #{tpu_custom_call.1} parent=91 // pred_check
          %p746 = pneg %p185
        $region110: #{tpu_custom_call.1} parent=91 // pred_check_branch
          %748 = sbr.rel (%p746) target = $region112
        $region111: #{tpu_custom_call.1} parent=91 // pred_region
          %750 = dma.done [#allocation9], 16
        $region112: #{tpu_custom_call.1} parent=91 // pred_fallthru
          _
        %s751 = sand.u32 %s484, 1
        %s752 = scalar_lea.sflag [#allocation12], %s751
        %s753 = sand.u32 %s484, 1
        %s754 = scalar_lea.vmem [#allocation11], %s753
        // Predicated region
        $region113: #{tpu_custom_call.1} parent=91 // pred_check
          %p755 = pneg %p497
        $region114: #{tpu_custom_call.1} parent=91 // pred_check_branch
          %757 = sbr.rel (%p755) target = $region116
        $region115: #{tpu_custom_call.1} parent=91 // pred_region
          %759 = dma.done %s752, 16
        $region116: #{tpu_custom_call.1} parent=91 // pred_fallthru
          _
        %s760 = sand.u32 %s62, 1
        %s761 = scalar_lea.sflag [#allocation3], %s760
        %s762 = sand.u32 %s62, 1
        %s763 = smul.addr %s762, 8
        %s764 = scalar_lea.vmem [#allocation2], %s763
        %p765 = pneg %p75
        %p766 = pneg %p72
        %s767 = sand.u32 %s42, 1
        %s768 = scalar_lea.sflag [#allocation6], %s767
        %s769 = sand.u32 %s88, 1
        %s770 = scalar_lea.vmem [#allocation5], %s769
        %p771 = pneg %p101
        %p772 = pneg %p98
        %p773 = pneg %p122
        %p774 = pneg %p119
        %p775 = pneg %p143
        %p776 = pneg %p140
        %p777 = pneg %p164
        %p778 = pneg %p161
        %p779 = pneg %p185
        %p780 = pneg %p182
        %p781 = scmp.lt.s32.totalorder %s47, 1
        %s782 = scalar_select %p781, %s47, 1
        %s783 = smul.addr %s782, 4
        %s784 = smul.addr %s783, 4
        %s785 = scalar_lea.vmem %s6, %s784
        %p786 = pneg %p211
        %p787 = pneg %p208
        %p788 = scmp.lt.s32.totalorder %s47, 1
        %s789 = scalar_select %p788, %s47, 1
        %s790 = scalar_lea.vmem %s7, %s789
        %p791 = pneg %p237
        %p792 = pneg %p234
        %p793 = scmp.lt.s32.totalorder %s47, 1
        %s794 = scalar_select %p793, %s47, 1
        %s795 = smul.addr %s794, 4
        %s796 = smul.addr %s795, 4
        %s797 = scalar_lea.vmem %s8, %s796
        %p798 = pneg %p263
        %p799 = pneg %p260
        %p800 = scmp.lt.s32.totalorder %s47, 1
        %s801 = scalar_select %p800, %s47, 1
        %s802 = scalar_lea.vmem %s9, %s801
        %p803 = pneg %p289
        %p804 = pneg %p286
        %p805 = scmp.lt.s32.totalorder %s47, 1
        %s806 = scalar_select %p805, %s47, 1
        %s807 = scalar_lea.vmem %s10, %s806
        %p808 = pneg %p315
        %p809 = pneg %p312
        %p810 = scmp.lt.s32.totalorder %s47, 1
        %s811 = scalar_select %p810, %s47, 1
        %s812 = scalar_lea.vmem %s11, %s811
        %p813 = pneg %p341
        %p814 = pneg %p338
        %p815 = scmp.lt.s32.totalorder %s47, 1
        %s816 = scalar_select %p815, %s47, 1
        %s817 = smul.addr %s816, 4
        %s818 = smul.addr %s817, 4
        %s819 = scalar_lea.vmem %s12, %s818
        %p820 = pneg %p367
        %p821 = pneg %p364
        %p822 = scmp.lt.s32.totalorder %s47, 1
        %s823 = scalar_select %p822, %s47, 1
        %s824 = scalar_lea.vmem %s13, %s823
        %p825 = pneg %p393
        %p826 = pneg %p390
        %p827 = scmp.lt.s32.totalorder %s47, 1
        %s828 = scalar_select %p827, %s47, 1
        %s829 = smul.addr %s828, 8
        %s830 = smul.addr %s829, 4
        %s831 = scalar_lea.vmem %s14, %s830
        %p832 = pneg %p419
        %p833 = pneg %p416
        %p834 = scmp.lt.s32.totalorder %s47, 1
        %s835 = scalar_select %p834, %s47, 1
        %s836 = scalar_lea.vmem %s15, %s835
        %p837 = pneg %p445
        %p838 = pneg %p442
        %p839 = scmp.lt.s32.totalorder %s47, 1
        %s840 = scalar_select %p839, %s47, 1
        %s841 = scalar_lea.vmem %s16, %s840
        %p842 = pneg %p471
        %p843 = pneg %p468
        %s844 = sand.u32 %s484, 1
        %s845 = scalar_lea.sflag [#allocation12], %s844
        %s846 = sand.u32 %s484, 1
        %s847 = scalar_lea.vmem [#allocation11], %s846
        %p848 = pneg %p497
        %p849 = pneg %p494
        %p850 = pneg %p523
        %p851 = pneg %p520
        %s852 = sand.u32 %s510, 1
        %s853 = scalar_lea.sflag [#allocation4], %s852
        %s854 = sand.u32 %s510, 1
        %s855 = smul.addr %s854, 8
        %s856 = scalar_lea.vmem [#allocation13], %s855
        %p857 = scmp.lt.s32.totalorder %s47, 1
        %s858 = scalar_select %p857, %s47, 1
        %s859 = smul.addr %s858, 4
        %s860 = smul.addr %s859, 4
        %s861 = scalar_lea.vmem %s6, %s860
        %p862 = scmp.lt.s32.totalorder %s47, 1
        %s863 = scalar_select %p862, %s47, 1
        %s864 = scalar_lea.vmem %s7, %s863
        %p865 = scmp.lt.s32.totalorder %s47, 1
        %s866 = scalar_select %p865, %s47, 1
        %s867 = smul.addr %s866, 4
        %s868 = smul.addr %s867, 4
        %s869 = scalar_lea.vmem %s8, %s868
        %p870 = scmp.lt.s32.totalorder %s47, 1
        %s871 = scalar_select %p870, %s47, 1
        %s872 = scalar_lea.vmem %s9, %s871
        %p873 = scmp.lt.s32.totalorder %s47, 1
        %s874 = scalar_select %p873, %s47, 1
        %s875 = scalar_lea.vmem %s10, %s874
        %p876 = scmp.lt.s32.totalorder %s47, 1
        %s877 = scalar_select %p876, %s47, 1
        %s878 = scalar_lea.vmem %s11, %s877
        %p879 = scmp.lt.s32.totalorder %s47, 1
        %s880 = scalar_select %p879, %s47, 1
        %s881 = smul.addr %s880, 4
        %s882 = smul.addr %s881, 4
        %s883 = scalar_lea.vmem %s12, %s882
        %p884 = scmp.lt.s32.totalorder %s47, 1
        %s885 = scalar_select %p884, %s47, 1
        %s886 = scalar_lea.vmem %s13, %s885
        %p887 = scmp.lt.s32.totalorder %s47, 1
        %s888 = scalar_select %p887, %s47, 1
        %s889 = smul.addr %s888, 8
        %s890 = smul.addr %s889, 4
        %s891 = scalar_lea.vmem %s14, %s890
        %p892 = scmp.lt.s32.totalorder %s47, 1
        %s893 = scalar_select %p892, %s47, 1
        %s894 = scalar_lea.vmem %s15, %s893
        %p895 = scmp.lt.s32.totalorder %s47, 1
        %s896 = scalar_select %p895, %s47, 1
        %s897 = scalar_lea.vmem %s16, %s896
        %p899 = scmp.eq.s32.totalorder %s47, 0
        // Predicated region
        $region117: #{tpu_custom_call.1} parent=91 // pred_check
          %p900 = pneg %p899
        $region118: #{tpu_custom_call.1} parent=91 // pred_check_branch
          %902 = sbr.rel (%p900) target = $region120
        $region119: #{tpu_custom_call.1} parent=91 // pred_region
          %v903 = vld [vmem:[%s721] sm:$0xff]
          %v904 = vpack.c.bf16 %v903, %v903
          %v905 = vld [vmem:[#allocation7] sm:$0xf]
          %v906 = vld [vmem:[#allocation7 + $0x4] sm:$0xf]
          %v907 = vld [vmem:[#allocation7 + $0x8] sm:$0xf]
          %v908 = vld [vmem:[#allocation7 + $0xc] sm:$0xf]
          %v909 = vld [vmem:[%s3] sm:$0x1]
          %v911 = vperm.slane %v909, 0
          %v917 = vunpack.c.l.b16 %v905
          %v918 = vunpack.c.l.b16 %v906
          %v919 = vunpack.c.l.b16 %v907
          %v920 = vunpack.c.l.b16 %v908
          %v921 = vpack.c.b16 %v918, %v917
          %v922 = vpack.c.b16 %v920, %v919
          %vm925 = vcmask 261120
          %v927 = vsel %vm925, %v904, 0
          %929 = vmatpush.bf16.msra.mxu0 0
          %930 = vmatpush.bf16.msra.mxu0 0
          %931 = vmatpush.bf16.msra.mxu0 0
          %932 = vmatpush.bf16.msra.mxu0 0
          %933 = vmatpush.bf16.msra.mxu0 0
          %934 = vmatpush.bf16.msra.mxu0 0
          %935 = vmatpush.bf16.msra.mxu0 %v922
          %936 = vmatpush.bf16.msra.mxu0 %v921
          %937 = vmatmul.bf16.gmra.mxu0 %v927
          %v938 = vpop.f32.mrf.mxu0
          %v939 = vadd.f32 %v911, %v938
          %v940 = vpop.f32.mrf.mxu0
          %941 = vdwg.mxu0
          %v942 = vld [vmem:[#allocation8] sm:$0x1]
          %v943 = vld [vmem:[#allocation10] sm:$0x1]
          %v944 = vsel %vm925, %v939, 0.0
          %945 = vadd.xlane.f32.xlu0 %v944
          %v946 = vpop.xlane.xlu0 %945
          %v947 = vrcp.pop 32.0
          %v948 = vmul.f32 32.0, %v947
          %v949 = vsub.f32 1.0, %v948
          %v950 = vmul.f32 %v947, %v949
          %v951 = vadd.f32 %v947, %v950
          %vm952 = vweird.f32 %v947
          %v953 = vsel %vm952, %v947, %v951
          %v954 = vmul.f32 %v946, %v953
          %v955 = vsub.f32 %v939, %v954
          %v956 = vmul.f32 %v955, %v955
          %v957 = vsel %vm925, %v956, 0.0
          %958 = vadd.xlane.f32.xlu0 %v957
          %v959 = vpop.xlane.xlu0 %958
          %v960 = vmul.f32 %v959, %v953
          %v961 = vadd.f32 %v960, 1e-05
          %v962 = vrsqrt.pop %v961
          %v963 = vmul.f32 %v962, %v961
          %v964 = vmul.f32 %v963, %v962
          %v965 = vmul.f32 0.5, %v964
          %v966 = vsub.f32 1.5, %v965
          %v967 = vmul.f32 %v962, %v966
          %vm968 = vweird.f32 %v961
          %vm969 = vweird.f32 %v962
          %vm970 = vmor %vm968, %vm969
          %v971 = vsel %vm970, %v962, %v967
          %v972 = vmul.f32 %v955, %v971
          %v974 = vperm.slane %v942, 0
          %v976 = vmul.f32 %v972, %v974
          %v978 = vperm.slane %v943, 0
          %v980 = vadd.f32 %v976, %v978
          %981 = vst.msk [vmem:[%s856] sm:$0xff] %vm925, %v980
        $region120: #{tpu_custom_call.1} parent=91 // pred_fallthru
          _
        %v982 = vld [vmem:[%s856] sm:$0xff]
        %v983 = vld [vmem:[%s730] sm:$0x1]
        %v984 = vpack.c.bf16 %v982, %v982
        %v985 = vld [vmem:[%s861] sm:$0xf]
        %v986 = vld [vmem:[%s861 + $0x4] sm:$0xf]
        %v987 = vld [vmem:[%s861 + $0x8] sm:$0xf]
        %v988 = vld [vmem:[%s861 + $0xc] sm:$0xf]
        %v989 = vld [vmem:[%s864] sm:$0x1]
        %v991 = vperm.slane %v989, 0
        %v997 = vunpack.c.l.b16 %v985
        %v998 = vunpack.c.l.b16 %v986
        %v999 = vunpack.c.l.b16 %v987
        %v1000 = vunpack.c.l.b16 %v988
        %v1001 = vpack.c.b16 %v998, %v997
        %v1002 = vpack.c.b16 %v1000, %v999
        %vm1005 = vcmask 261120
        %v1007 = vsel %vm1005, %v984, 0
        %1009 = vmatpush.bf16.msra.mxu0 0
        %1010 = vmatpush.bf16.msra.mxu0 0
        %1011 = vmatpush.bf16.msra.mxu0 0
        %1012 = vmatpush.bf16.msra.mxu0 0
        %1013 = vmatpush.bf16.msra.mxu0 0
        %1014 = vmatpush.bf16.msra.mxu0 0
        %1015 = vmatpush.bf16.msra.mxu0 %v1002
        %1016 = vmatpush.bf16.msra.mxu0 %v1001
        %1017 = vmatmul.bf16.gmra.mxu0 %v1007
        %v1018 = vpop.f32.mrf.mxu0
        %v1019 = vadd.f32 %v991, %v1018
        %v1020 = vpop.f32.mrf.mxu0
        %1021 = vdwg.mxu0
        %1023 = vrot.lane.b32.xlu0 %v1019, 120
        %v1024 = vpop.permute.xlu0 %1023
        %1026 = vrot.lane.b32.xlu0 %v1019, 112
        %v1027 = vpop.permute.xlu0 %1026
        %1029 = vrot.lane.b32.xlu0 %v1019, 104
        %v1030 = vpop.permute.xlu0 %1029
        %v1032 = vrot.slane %v1027, 4
        %vm1033 = vcmask 1047556
        %v1034 = vsel %vm1033, %v1032, %v1019
        %v1035 = vrot.slane %v1019, 4
        %v1036 = vsel %vm1033, %v1027, %v1035
        %v1038 = vunpack.c.l.s4 1983009808
        %v1039 = vunpack.c.0.s8 %v1038
        %v1040 = vperm.slane %v1034, %v1039
        %v1042 = vunpack.c.l.s4 1983009808
        %v1043 = vunpack.c.0.s8 %v1042
        %v1044 = vperm.slane %v1036, %v1043
        %v1045 = vrot.slane %v1030, 4
        %v1046 = vsel %vm1033, %v1045, %v1024
        %v1047 = vrot.slane %v1024, 4
        %v1048 = vsel %vm1033, %v1030, %v1047
        %v1050 = vunpack.c.l.s4 1983009808
        %v1051 = vunpack.c.0.s8 %v1050
        %v1052 = vperm.slane %v1046, %v1051
        %v1054 = vunpack.c.l.s4 1983009808
        %v1055 = vunpack.c.0.s8 %v1054
        %v1056 = vperm.slane %v1048, %v1055
        %v1057 = vrot.slane %v1052, 4
        %v1058 = vsel %vm1033, %v1057, %v1040
        %v1059 = vrot.slane %v1040, 4
        %v1060 = vsel %vm1033, %v1052, %v1059
        %v1062 = vunpack.c.l.s4 1934713408
        %v1063 = vunpack.c.0.s8 %v1062
        %v1064 = vperm.slane %v1058, %v1063
        %v1066 = vunpack.c.l.s4 1934713408
        %v1067 = vunpack.c.0.s8 %v1066
        %v1068 = vperm.slane %v1060, %v1067
        %v1069 = vrot.slane %v1056, 4
        %v1070 = vsel %vm1033, %v1069, %v1044
        %v1071 = vrot.slane %v1044, 4
        %v1072 = vsel %vm1033, %v1056, %v1071
        %v1074 = vunpack.c.l.s4 1934713408
        %v1075 = vunpack.c.0.s8 %v1074
        %v1076 = vperm.slane %v1070, %v1075
        %v1078 = vunpack.c.l.s4 1934713408
        %v1079 = vunpack.c.0.s8 %v1078
        %v1080 = vperm.slane %v1072, %v1079
        %v1081 = vrot.slane %v1064, 4
        %v1082 = vsel %vm1033, 0.0, %v1081
        %v1083 = vrot.slane %v1068, 4
        %v1084 = vsel %vm1033, 0.0, %v1083
        %v1085 = vrot.slane %v1076, 4
        %v1086 = vsel %vm1033, 0.0, %v1085
        %v1087 = vrot.slane %v1080, 4
        %v1088 = vsel %vm1033, 0.0, %v1087
        %v1089 = vsel %vm1033, %v1083, %v1064
        %v1091 = vunpack.c.l.s4 1983009808
        %v1092 = vunpack.c.0.s8 %v1091
        %v1093 = vperm.slane %v1089, %v1092
        %v1094 = vrot.slane %v1084, 4
        %v1095 = vsel %vm1033, %v1094, %v1082
        %v1097 = vunpack.c.l.s4 1983009808
        %v1098 = vunpack.c.0.s8 %v1097
        %v1099 = vperm.slane %v1095, %v1098
        %v1100 = vsel %vm1033, %v1087, %v1076
        %v1102 = vunpack.c.l.s4 1983009808
        %v1103 = vunpack.c.0.s8 %v1102
        %v1104 = vperm.slane %v1100, %v1103
        %v1105 = vrot.slane %v1088, 4
        %v1106 = vsel %vm1033, %v1105, %v1086
        %v1108 = vunpack.c.l.s4 1983009808
        %v1109 = vunpack.c.0.s8 %v1108
        %v1110 = vperm.slane %v1106, %v1109
        %v1111 = vrot.slane %v1099, 4
        %v1112 = vsel %vm1033, %v1111, %v1093
        %v1113 = vrot.slane %v1093, 4
        %v1114 = vsel %vm1033, %v1099, %v1113
        %v1116 = vunpack.c.l.s4 1934713408
        %v1117 = vunpack.c.0.s8 %v1116
        %v1118 = vperm.slane %v1112, %v1117
        %v1120 = vunpack.c.l.s4 1934713408
        %v1121 = vunpack.c.0.s8 %v1120
        %v1122 = vperm.slane %v1114, %v1121
        %v1123 = vrot.slane %v1110, 4
        %v1124 = vsel %vm1033, %v1123, %v1104
        %v1125 = vrot.slane %v1104, 4
        %v1126 = vsel %vm1033, %v1110, %v1125
        %v1128 = vunpack.c.l.s4 1934713408
        %v1129 = vunpack.c.0.s8 %v1128
        %v1130 = vperm.slane %v1124, %v1129
        %v1132 = vunpack.c.l.s4 1934713408
        %v1133 = vunpack.c.0.s8 %v1132
        %v1134 = vperm.slane %v1126, %v1133
        %v1135 = vrot.slane %v1130, 4
        %v1136 = vsel %vm1033, %v1135, %v1118
        %v1137 = vrot.slane %v1118, 4
        %v1138 = vsel %vm1033, %v1130, %v1137
        %v1139 = vrot.slane %v1134, 4
        %v1140 = vsel %vm1033, %v1139, %v1122
        %v1141 = vrot.slane %v1122, 4
        %v1142 = vsel %vm1033, %v1134, %v1141
        %1143 = vrot.lane.b32.xlu0 %v1019, 96
        %v1144 = vpop.permute.xlu0 %1143
        %1145 = vrot.lane.b32.xlu0 %v1024, 96
        %v1146 = vpop.permute.xlu0 %1145
        %1147 = vrot.lane.b32.xlu0 %v1027, 96
        %v1148 = vpop.permute.xlu0 %1147
        %1149 = vrot.lane.b32.xlu0 %v1030, 96
        %v1150 = vpop.permute.xlu0 %1149
        %v1155 = vrot.slane %v1148, 4
        %v1156 = vsel %vm1033, %v1155, %v1144
        %v1157 = vrot.slane %v1144, 4
        %v1158 = vsel %vm1033, %v1148, %v1157
        %v1160 = vunpack.c.l.s4 1983009808
        %v1161 = vunpack.c.0.s8 %v1160
        %v1162 = vperm.slane %v1156, %v1161
        %v1164 = vunpack.c.l.s4 1983009808
        %v1165 = vunpack.c.0.s8 %v1164
        %v1166 = vperm.slane %v1158, %v1165
        %v1167 = vrot.slane %v1150, 4
        %v1168 = vsel %vm1033, %v1167, %v1146
        %v1169 = vrot.slane %v1146, 4
        %v1170 = vsel %vm1033, %v1150, %v1169
        %v1172 = vunpack.c.l.s4 1983009808
        %v1173 = vunpack.c.0.s8 %v1172
        %v1174 = vperm.slane %v1168, %v1173
        %v1176 = vunpack.c.l.s4 1983009808
        %v1177 = vunpack.c.0.s8 %v1176
        %v1178 = vperm.slane %v1170, %v1177
        %v1179 = vrot.slane %v1174, 4
        %v1180 = vsel %vm1033, %v1179, %v1162
        %v1181 = vrot.slane %v1162, 4
        %v1182 = vsel %vm1033, %v1174, %v1181
        %v1184 = vunpack.c.l.s4 1934713408
        %v1185 = vunpack.c.0.s8 %v1184
        %v1186 = vperm.slane %v1180, %v1185
        %v1188 = vunpack.c.l.s4 1934713408
        %v1189 = vunpack.c.0.s8 %v1188
        %v1190 = vperm.slane %v1182, %v1189
        %v1191 = vrot.slane %v1178, 4
        %v1192 = vsel %vm1033, %v1191, %v1166
        %v1193 = vrot.slane %v1166, 4
        %v1194 = vsel %vm1033, %v1178, %v1193
        %v1196 = vunpack.c.l.s4 1934713408
        %v1197 = vunpack.c.0.s8 %v1196
        %v1198 = vperm.slane %v1192, %v1197
        %v1200 = vunpack.c.l.s4 1934713408
        %v1201 = vunpack.c.0.s8 %v1200
        %v1202 = vperm.slane %v1194, %v1201
        %v1203 = vrot.slane %v1186, 4
        %v1204 = vsel %vm1033, 0.0, %v1203
        %v1205 = vrot.slane %v1190, 4
        %v1206 = vsel %vm1033, 0.0, %v1205
        %v1207 = vrot.slane %v1198, 4
        %v1208 = vsel %vm1033, 0.0, %v1207
        %v1209 = vrot.slane %v1202, 4
        %v1210 = vsel %vm1033, 0.0, %v1209
        %v1211 = vsel %vm1033, %v1205, %v1186
        %v1213 = vunpack.c.l.s4 1983009808
        %v1214 = vunpack.c.0.s8 %v1213
        %v1215 = vperm.slane %v1211, %v1214
        %v1216 = vrot.slane %v1206, 4
        %v1217 = vsel %vm1033, %v1216, %v1204
        %v1219 = vunpack.c.l.s4 1983009808
        %v1220 = vunpack.c.0.s8 %v1219
        %v1221 = vperm.slane %v1217, %v1220
        %v1222 = vsel %vm1033, %v1209, %v1198
        %v1224 = vunpack.c.l.s4 1983009808
        %v1225 = vunpack.c.0.s8 %v1224
        %v1226 = vperm.slane %v1222, %v1225
        %v1227 = vrot.slane %v1210, 4
        %v1228 = vsel %vm1033, %v1227, %v1208
        %v1230 = vunpack.c.l.s4 1983009808
        %v1231 = vunpack.c.0.s8 %v1230
        %v1232 = vperm.slane %v1228, %v1231
        %v1233 = vrot.slane %v1221, 4
        %v1234 = vsel %vm1033, %v1233, %v1215
        %v1235 = vrot.slane %v1215, 4
        %v1236 = vsel %vm1033, %v1221, %v1235
        %v1238 = vunpack.c.l.s4 1934713408
        %v1239 = vunpack.c.0.s8 %v1238
        %v1240 = vperm.slane %v1234, %v1239
        %v1242 = vunpack.c.l.s4 1934713408
        %v1243 = vunpack.c.0.s8 %v1242
        %v1244 = vperm.slane %v1236, %v1243
        %v1245 = vrot.slane %v1232, 4
        %v1246 = vsel %vm1033, %v1245, %v1226
        %v1247 = vrot.slane %v1226, 4
        %v1248 = vsel %vm1033, %v1232, %v1247
        %v1250 = vunpack.c.l.s4 1934713408
        %v1251 = vunpack.c.0.s8 %v1250
        %v1252 = vperm.slane %v1246, %v1251
        %v1254 = vunpack.c.l.s4 1934713408
        %v1255 = vunpack.c.0.s8 %v1254
        %v1256 = vperm.slane %v1248, %v1255
        %v1257 = vrot.slane %v1252, 4
        %v1258 = vsel %vm1033, %v1257, %v1240
        %v1259 = vrot.slane %v1240, 4
        %v1260 = vsel %vm1033, %v1252, %v1259
        %v1261 = vrot.slane %v1256, 4
        %v1262 = vsel %vm1033, %v1261, %v1244
        %v1263 = vrot.slane %v1244, 4
        %v1264 = vsel %vm1033, %v1256, %v1263
        %1265 = vrot.lane.b32.xlu0 %v1019, 64
        %v1266 = vpop.permute.xlu0 %1265
        %1267 = vrot.lane.b32.xlu0 %v1024, 64
        %v1268 = vpop.permute.xlu0 %1267
        %1269 = vrot.lane.b32.xlu0 %v1027, 64
        %v1270 = vpop.permute.xlu0 %1269
        %1271 = vrot.lane.b32.xlu0 %v1030, 64
        %v1272 = vpop.permute.xlu0 %1271
        %v1277 = vrot.slane %v1270, 4
        %v1278 = vsel %vm1033, %v1277, %v1266
        %v1279 = vrot.slane %v1266, 4
        %v1280 = vsel %vm1033, %v1270, %v1279
        %v1282 = vunpack.c.l.s4 1983009808
        %v1283 = vunpack.c.0.s8 %v1282
        %v1284 = vperm.slane %v1278, %v1283
        %v1286 = vunpack.c.l.s4 1983009808
        %v1287 = vunpack.c.0.s8 %v1286
        %v1288 = vperm.slane %v1280, %v1287
        %v1289 = vrot.slane %v1272, 4
        %v1290 = vsel %vm1033, %v1289, %v1268
        %v1291 = vrot.slane %v1268, 4
        %v1292 = vsel %vm1033, %v1272, %v1291
        %v1294 = vunpack.c.l.s4 1983009808
        %v1295 = vunpack.c.0.s8 %v1294
        %v1296 = vperm.slane %v1290, %v1295
        %v1298 = vunpack.c.l.s4 1983009808
        %v1299 = vunpack.c.0.s8 %v1298
        %v1300 = vperm.slane %v1292, %v1299
        %v1301 = vrot.slane %v1296, 4
        %v1302 = vsel %vm1033, %v1301, %v1284
        %v1303 = vrot.slane %v1284, 4
        %v1304 = vsel %vm1033, %v1296, %v1303
        %v1306 = vunpack.c.l.s4 1934713408
        %v1307 = vunpack.c.0.s8 %v1306
        %v1308 = vperm.slane %v1302, %v1307
        %v1310 = vunpack.c.l.s4 1934713408
        %v1311 = vunpack.c.0.s8 %v1310
        %v1312 = vperm.slane %v1304, %v1311
        %v1313 = vrot.slane %v1300, 4
        %v1314 = vsel %vm1033, %v1313, %v1288
        %v1315 = vrot.slane %v1288, 4
        %v1316 = vsel %vm1033, %v1300, %v1315
        %v1318 = vunpack.c.l.s4 1934713408
        %v1319 = vunpack.c.0.s8 %v1318
        %v1320 = vperm.slane %v1314, %v1319
        %v1322 = vunpack.c.l.s4 1934713408
        %v1323 = vunpack.c.0.s8 %v1322
        %v1324 = vperm.slane %v1316, %v1323
        %v1325 = vrot.slane %v1308, 4
        %v1326 = vsel %vm1033, 0.0, %v1325
        %v1327 = vrot.slane %v1312, 4
        %v1328 = vsel %vm1033, 0.0, %v1327
        %v1329 = vrot.slane %v1320, 4
        %v1330 = vsel %vm1033, 0.0, %v1329
        %v1331 = vrot.slane %v1324, 4
        %v1332 = vsel %vm1033, 0.0, %v1331
        %v1333 = vsel %vm1033, %v1327, %v1308
        %v1335 = vunpack.c.l.s4 1983009808
        %v1336 = vunpack.c.0.s8 %v1335
        %v1337 = vperm.slane %v1333, %v1336
        %v1338 = vrot.slane %v1328, 4
        %v1339 = vsel %vm1033, %v1338, %v1326
        %v1341 = vunpack.c.l.s4 1983009808
        %v1342 = vunpack.c.0.s8 %v1341
        %v1343 = vperm.slane %v1339, %v1342
        %v1344 = vsel %vm1033, %v1331, %v1320
        %v1346 = vunpack.c.l.s4 1983009808
        %v1347 = vunpack.c.0.s8 %v1346
        %v1348 = vperm.slane %v1344, %v1347
        %v1349 = vrot.slane %v1332, 4
        %v1350 = vsel %vm1033, %v1349, %v1330
        %v1352 = vunpack.c.l.s4 1983009808
        %v1353 = vunpack.c.0.s8 %v1352
        %v1354 = vperm.slane %v1350, %v1353
        %v1355 = vrot.slane %v1343, 4
        %v1356 = vsel %vm1033, %v1355, %v1337
        %v1357 = vrot.slane %v1337, 4
        %v1358 = vsel %vm1033, %v1343, %v1357
        %v1360 = vunpack.c.l.s4 1934713408
        %v1361 = vunpack.c.0.s8 %v1360
        %v1362 = vperm.slane %v1356, %v1361
        %v1364 = vunpack.c.l.s4 1934713408
        %v1365 = vunpack.c.0.s8 %v1364
        %v1366 = vperm.slane %v1358, %v1365
        %v1367 = vrot.slane %v1354, 4
        %v1368 = vsel %vm1033, %v1367, %v1348
        %v1369 = vrot.slane %v1348, 4
        %v1370 = vsel %vm1033, %v1354, %v1369
        %v1372 = vunpack.c.l.s4 1934713408
        %v1373 = vunpack.c.0.s8 %v1372
        %v1374 = vperm.slane %v1368, %v1373
        %v1376 = vunpack.c.l.s4 1934713408
        %v1377 = vunpack.c.0.s8 %v1376
        %v1378 = vperm.slane %v1370, %v1377
        %v1379 = vrot.slane %v1374, 4
        %v1380 = vsel %vm1033, %v1379, %v1362
        %v1381 = vrot.slane %v1362, 4
        %v1382 = vsel %vm1033, %v1374, %v1381
        %v1383 = vrot.slane %v1378, 4
        %v1384 = vsel %vm1033, %v1383, %v1366
        %v1385 = vrot.slane %v1366, 4
        %v1386 = vsel %vm1033, %v1378, %v1385
        %v1387 = vpack.c.bf16 %v1136, %v1136
        %v1388 = vpack.c.bf16 %v1138, %v1138
        %v1389 = vpack.c.bf16 %v1140, %v1140
        %v1390 = vpack.c.bf16 %v1142, %v1142
        %v1391 = vpack.c.bf16 %v1258, %v1258
        %v1392 = vpack.c.bf16 %v1260, %v1260
        %v1393 = vpack.c.bf16 %v1262, %v1262
        %v1394 = vpack.c.bf16 %v1264, %v1264
        %vm1395 = vcmask 64512
        %v1397 = vsel %vm1395, %v1387, 0
        %v1400 = vsel %vm1395, %v1391, 0
        %1402 = vmatpush.bf16.xpose.msra.mxu0 0
        %1403 = vmatpush.bf16.xpose.msra.mxu0 0
        %1404 = vmatpush.bf16.xpose.msra.mxu0 0
        %1405 = vmatpush.bf16.xpose.msra.mxu0 0
        %1406 = vmatpush.bf16.xpose.msra.mxu0 0
        %1407 = vmatpush.bf16.xpose.msra.mxu0 0
        %1408 = vmatpush.bf16.xpose.msra.mxu0 0
        %1409 = vmatpush.bf16.xpose.msra.mxu0 %v1400
        %1410 = vmatmul.bf16.gmra.mxu0 %v1397
        %v1411 = vpop.f32.mrf.mxu0
        %v1412 = vadd.f32 0.0, %v1411
        %v1413 = vpop.f32.mrf.mxu0
        %1414 = vdwg.mxu0
        %v1416 = vsel %vm1395, %v1388, 0
        %v1419 = vsel %vm1395, %v1392, 0
        %1421 = vmatpush.bf16.xpose.msra.mxu0 0
        %1422 = vmatpush.bf16.xpose.msra.mxu0 0
        %1423 = vmatpush.bf16.xpose.msra.mxu0 0
        %1424 = vmatpush.bf16.xpose.msra.mxu0 0
        %1425 = vmatpush.bf16.xpose.msra.mxu0 0
        %1426 = vmatpush.bf16.xpose.msra.mxu0 0
        %1427 = vmatpush.bf16.xpose.msra.mxu0 0
        %1428 = vmatpush.bf16.xpose.msra.mxu0 %v1419
        %1429 = vmatmul.bf16.gmra.mxu0 %v1416
        %v1430 = vpop.f32.mrf.mxu0
        %v1431 = vadd.f32 0.0, %v1430
        %v1432 = vpop.f32.mrf.mxu0
        %1433 = vdwg.mxu0
        %v1435 = vsel %vm1395, %v1389, 0
        %v1438 = vsel %vm1395, %v1393, 0
        %1440 = vmatpush.bf16.xpose.msra.mxu0 0
        %1441 = vmatpush.bf16.xpose.msra.mxu0 0
        %1442 = vmatpush.bf16.xpose.msra.mxu0 0
        %1443 = vmatpush.bf16.xpose.msra.mxu0 0
        %1444 = vmatpush.bf16.xpose.msra.mxu0 0
        %1445 = vmatpush.bf16.xpose.msra.mxu0 0
        %1446 = vmatpush.bf16.xpose.msra.mxu0 0
        %1447 = vmatpush.bf16.xpose.msra.mxu0 %v1438
        %1448 = vmatmul.bf16.gmra.mxu0 %v1435
        %v1449 = vpop.f32.mrf.mxu0
        %v1450 = vadd.f32 0.0, %v1449
        %v1451 = vpop.f32.mrf.mxu0
        %1452 = vdwg.mxu0
        %v1454 = vsel %vm1395, %v1390, 0
        %v1457 = vsel %vm1395, %v1394, 0
        %1459 = vmatpush.bf16.xpose.msra.mxu0 0
        %1460 = vmatpush.bf16.xpose.msra.mxu0 0
        %1461 = vmatpush.bf16.xpose.msra.mxu0 0
        %1462 = vmatpush.bf16.xpose.msra.mxu0 0
        %1463 = vmatpush.bf16.xpose.msra.mxu0 0
        %1464 = vmatpush.bf16.xpose.msra.mxu0 0
        %1465 = vmatpush.bf16.xpose.msra.mxu0 0
        %1466 = vmatpush.bf16.xpose.msra.mxu0 %v1457
        %1467 = vmatmul.bf16.gmra.mxu0 %v1454
        %v1468 = vpop.f32.mrf.mxu0
        %v1469 = vadd.f32 0.0, %v1468
        %v1470 = vpop.f32.mrf.mxu0
        %1471 = vdwg.mxu0
        %v1472 = vmul.f32 %v1412, 0.35355338
        %v1473 = vmul.f32 %v1431, 0.35355338
        %v1474 = vmul.f32 %v1450, 0.35355338
        %v1475 = vmul.f32 %v1469, 0.35355338
        %v1477 = vperm.slane %v983, 0
        %v1479 = vadd.f32 %v1472, %v1477
        %v1480 = vadd.f32 %v1473, %v1477
        %v1481 = vadd.f32 %v1474, %v1477
        %v1482 = vadd.f32 %v1475, %v1477
        %v1483 = vsel %vm1395, %v1479, -inf
        %1484 = vmax.xlane.f32.xlu0 %v1483
        %v1485 = vpop.xlane.xlu0 %1484
        %v1486 = vsel %vm1395, %v1480, -inf
        %1487 = vmax.xlane.f32.xlu0 %v1486
        %v1488 = vpop.xlane.xlu0 %1487
        %v1489 = vsel %vm1395, %v1481, -inf
        %1490 = vmax.xlane.f32.xlu0 %v1489
        %v1491 = vpop.xlane.xlu0 %1490
        %v1492 = vsel %vm1395, %v1482, -inf
        %1493 = vmax.xlane.f32.xlu0 %v1492
        %v1494 = vpop.xlane.xlu0 %1493
        %v1495 = vsub.f32 %v1479, %v1485
        %v1496 = vsub.f32 %v1480, %v1488
        %v1497 = vsub.f32 %v1481, %v1491
        %v1498 = vsub.f32 %v1482, %v1494
        %v1499 = vmul.f32 %v1495, 1.442695
        %v1500 = vpow.pop %v1499
        %v1501 = vmul.f32 %v1496, 1.442695
        %v1502 = vpow.pop %v1501
        %v1503 = vmul.f32 %v1497, 1.442695
        %v1504 = vpow.pop %v1503
        %v1505 = vmul.f32 %v1498, 1.442695
        %v1506 = vpow.pop %v1505
        %v1507 = vsel %vm1395, %v1500, 0.0
        %1508 = vadd.xlane.f32.xlu0 %v1507
        %v1509 = vpop.xlane.xlu0 %1508
        %v1510 = vsel %vm1395, %v1502, 0.0
        %1511 = vadd.xlane.f32.xlu0 %v1510
        %v1512 = vpop.xlane.xlu0 %1511
        %v1513 = vsel %vm1395, %v1504, 0.0
        %1514 = vadd.xlane.f32.xlu0 %v1513
        %v1515 = vpop.xlane.xlu0 %1514
        %v1516 = vsel %vm1395, %v1506, 0.0
        %1517 = vadd.xlane.f32.xlu0 %v1516
        %v1518 = vpop.xlane.xlu0 %1517
        %v1519 = vrcp.pop %v1509
        %v1520 = vrcp.pop %v1512
        %v1521 = vrcp.pop %v1515
        %v1522 = vrcp.pop %v1518
        %v1523 = vmul.f32 %v1500, %v1519
        %v1524 = vmul.f32 %v1502, %v1520
        %v1525 = vmul.f32 %v1504, %v1521
        %v1526 = vmul.f32 %v1506, %v1522
        %v1527 = vpack.c.bf16 %v1523, %v1523
        %v1528 = vpack.c.bf16 %v1524, %v1524
        %v1529 = vpack.c.bf16 %v1525, %v1525
        %v1530 = vpack.c.bf16 %v1526, %v1526
        %v1531 = vpack.c.bf16 %v1380, %v1380
        %v1532 = vpack.c.bf16 %v1382, %v1382
        %v1533 = vpack.c.bf16 %v1384, %v1384
        %v1534 = vpack.c.bf16 %v1386, %v1386
        %v1536 = vsel %vm1395, %v1527, 0
        %vm1538 = vcmask 1043456
        %v1540 = vsel %vm1538, %v1531, 0
        %1542 = vmatpush.bf16.msra.mxu0 0
        %1543 = vmatpush.bf16.msra.mxu0 0
        %1544 = vmatpush.bf16.msra.mxu0 0
        %1545 = vmatpush.bf16.msra.mxu0 0
        %1546 = vmatpush.bf16.msra.mxu0 0
        %1547 = vmatpush.bf16.msra.mxu0 0
        %1548 = vmatpush.bf16.msra.mxu0 0
        %1549 = vmatpush.bf16.msra.mxu0 %v1540
        %1550 = vmatmul.bf16.gmra.mxu0 %v1536
        %v1551 = vpop.f32.mrf.mxu0
        %v1552 = vadd.f32 0.0, %v1551
        %v1553 = vpop.f32.mrf.mxu0
        %1554 = vdwg.mxu0
        %v1556 = vsel %vm1395, %v1528, 0
        %v1559 = vsel %vm1538, %v1532, 0
        %1561 = vmatpush.bf16.msra.mxu0 0
        %1562 = vmatpush.bf16.msra.mxu0 0
        %1563 = vmatpush.bf16.msra.mxu0 0
        %1564 = vmatpush.bf16.msra.mxu0 0
        %1565 = vmatpush.bf16.msra.mxu0 0
        %1566 = vmatpush.bf16.msra.mxu0 0
        %1567 = vmatpush.bf16.msra.mxu0 0
        %1568 = vmatpush.bf16.msra.mxu0 %v1559
        %1569 = vmatmul.bf16.gmra.mxu0 %v1556
        %v1570 = vpop.f32.mrf.mxu0
        %v1571 = vadd.f32 0.0, %v1570
        %v1572 = vpop.f32.mrf.mxu0
        %1573 = vdwg.mxu0
        %v1575 = vsel %vm1395, %v1529, 0
        %v1578 = vsel %vm1538, %v1533, 0
        %1580 = vmatpush.bf16.msra.mxu0 0
        %1581 = vmatpush.bf16.msra.mxu0 0
        %1582 = vmatpush.bf16.msra.mxu0 0
        %1583 = vmatpush.bf16.msra.mxu0 0
        %1584 = vmatpush.bf16.msra.mxu0 0
        %1585 = vmatpush.bf16.msra.mxu0 0
        %1586 = vmatpush.bf16.msra.mxu0 0
        %1587 = vmatpush.bf16.msra.mxu0 %v1578
        %1588 = vmatmul.bf16.gmra.mxu0 %v1575
        %v1589 = vpop.f32.mrf.mxu0
        %v1590 = vadd.f32 0.0, %v1589
        %v1591 = vpop.f32.mrf.mxu0
        %1592 = vdwg.mxu0
        %v1594 = vsel %vm1395, %v1530, 0
        %v1597 = vsel %vm1538, %v1534, 0
        %1599 = vmatpush.bf16.msra.mxu0 0
        %1600 = vmatpush.bf16.msra.mxu0 0
        %1601 = vmatpush.bf16.msra.mxu0 0
        %1602 = vmatpush.bf16.msra.mxu0 0
        %1603 = vmatpush.bf16.msra.mxu0 0
        %1604 = vmatpush.bf16.msra.mxu0 0
        %1605 = vmatpush.bf16.msra.mxu0 0
        %1606 = vmatpush.bf16.msra.mxu0 %v1597
        %1607 = vmatmul.bf16.gmra.mxu0 %v1594
        %v1608 = vpop.f32.mrf.mxu0
        %v1609 = vadd.f32 0.0, %v1608
        %v1610 = vpop.f32.mrf.mxu0
        %1611 = vdwg.mxu0
        %v1612 = vrot.slane %v1590, 4
        %v1613 = vsel %vm1033, %v1612, %v1552
        %v1614 = vrot.slane %v1552, 4
        %v1615 = vsel %vm1033, %v1590, %v1614
        %v1617 = vunpack.c.l.s4 1983009808
        %v1618 = vunpack.c.0.s8 %v1617
        %v1619 = vperm.slane %v1613, %v1618
        %v1621 = vunpack.c.l.s4 1983009808
        %v1622 = vunpack.c.0.s8 %v1621
        %v1623 = vperm.slane %v1615, %v1622
        %v1624 = vrot.slane %v1609, 4
        %v1625 = vsel %vm1033, %v1624, %v1571
        %v1626 = vrot.slane %v1571, 4
        %v1627 = vsel %vm1033, %v1609, %v1626
        %v1629 = vunpack.c.l.s4 1983009808
        %v1630 = vunpack.c.0.s8 %v1629
        %v1631 = vperm.slane %v1625, %v1630
        %v1633 = vunpack.c.l.s4 1983009808
        %v1634 = vunpack.c.0.s8 %v1633
        %v1635 = vperm.slane %v1627, %v1634
        %v1636 = vrot.slane %v1631, 4
        %v1637 = vsel %vm1033, %v1636, %v1619
        %v1638 = vrot.slane %v1619, 4
        %v1639 = vsel %vm1033, %v1631, %v1638
        %v1641 = vunpack.c.l.s4 1934713408
        %v1642 = vunpack.c.0.s8 %v1641
        %v1643 = vperm.slane %v1637, %v1642
        %v1645 = vunpack.c.l.s4 1934713408
        %v1646 = vunpack.c.0.s8 %v1645
        %v1647 = vperm.slane %v1639, %v1646
        %v1648 = vrot.slane %v1635, 4
        %v1649 = vsel %vm1033, %v1648, %v1623
        %v1650 = vrot.slane %v1623, 4
        %v1651 = vsel %vm1033, %v1635, %v1650
        %v1653 = vunpack.c.l.s4 1934713408
        %v1654 = vunpack.c.0.s8 %v1653
        %v1655 = vperm.slane %v1649, %v1654
        %v1657 = vunpack.c.l.s4 1934713408
        %v1658 = vunpack.c.0.s8 %v1657
        %v1659 = vperm.slane %v1651, %v1658
        %v1660 = vrot.slane %v1643, 4
        %v1661 = vsel %vm1033, 0.0, %v1660
        %v1662 = vrot.slane %v1647, 4
        %v1663 = vsel %vm1033, 0.0, %v1662
        %v1664 = vrot.slane %v1655, 4
        %v1665 = vsel %vm1033, 0.0, %v1664
        %v1666 = vrot.slane %v1659, 4
        %v1667 = vsel %vm1033, 0.0, %v1666
        %v1668 = vsel %vm1033, %v1662, %v1643
        %v1670 = vunpack.c.l.s4 1983009808
        %v1671 = vunpack.c.0.s8 %v1670
        %v1672 = vperm.slane %v1668, %v1671
        %v1673 = vrot.slane %v1663, 4
        %v1674 = vsel %vm1033, %v1673, %v1661
        %v1676 = vunpack.c.l.s4 1983009808
        %v1677 = vunpack.c.0.s8 %v1676
        %v1678 = vperm.slane %v1674, %v1677
        %v1679 = vsel %vm1033, %v1666, %v1655
        %v1681 = vunpack.c.l.s4 1983009808
        %v1682 = vunpack.c.0.s8 %v1681
        %v1683 = vperm.slane %v1679, %v1682
        %v1684 = vrot.slane %v1667, 4
        %v1685 = vsel %vm1033, %v1684, %v1665
        %v1687 = vunpack.c.l.s4 1983009808
        %v1688 = vunpack.c.0.s8 %v1687
        %v1689 = vperm.slane %v1685, %v1688
        %v1690 = vrot.slane %v1678, 4
        %v1691 = vsel %vm1033, %v1690, %v1672
        %v1692 = vrot.slane %v1672, 4
        %v1693 = vsel %vm1033, %v1678, %v1692
        %v1695 = vunpack.c.l.s4 1934713408
        %v1696 = vunpack.c.0.s8 %v1695
        %v1697 = vperm.slane %v1691, %v1696
        %v1699 = vunpack.c.l.s4 1934713408
        %v1700 = vunpack.c.0.s8 %v1699
        %v1701 = vperm.slane %v1693, %v1700
        %v1702 = vrot.slane %v1689, 4
        %v1703 = vsel %vm1033, %v1702, %v1683
        %v1704 = vrot.slane %v1683, 4
        %v1705 = vsel %vm1033, %v1689, %v1704
        %v1707 = vunpack.c.l.s4 1934713408
        %v1708 = vunpack.c.0.s8 %v1707
        %v1709 = vperm.slane %v1703, %v1708
        %v1711 = vunpack.c.l.s4 1934713408
        %v1712 = vunpack.c.0.s8 %v1711
        %v1713 = vperm.slane %v1705, %v1712
        %v1714 = vrot.slane %v1709, 4
        %v1715 = vsel %vm1033, %v1714, %v1697
        %v1716 = vrot.slane %v1697, 4
        %v1717 = vsel %vm1033, %v1709, %v1716
        %v1718 = vrot.slane %v1713, 4
        %v1719 = vsel %vm1033, %v1718, %v1701
        %v1720 = vrot.slane %v1701, 4
        %v1721 = vsel %vm1033, %v1713, %v1720
        %1723 = vrot.lane.b32.xlu0 %v1717, 8
        %v1724 = vpop.permute.xlu0 %1723
        %1727 = vrot.lane.b32.xlu0 %v1719, 16
        %v1728 = vpop.permute.xlu0 %1727
        %1731 = vrot.lane.b32.xlu0 %v1721, 24
        %v1732 = vpop.permute.xlu0 %1731
        %v1734 = vsel %vm1395, %v1715, %v1724
        %vm1735 = vcmask 130048
        %v1736 = vsel %vm1735, %v1734, %v1728
        %vm1737 = vcmask 195584
        %v1738 = vsel %vm1737, %v1736, %v1732
        %v1739 = vpack.c.bf16 %v1738, %v1738
        %v1740 = vld [vmem:[%s869] sm:$0xf]
        %v1741 = vld [vmem:[%s869 + $0x4] sm:$0xf]
        %v1742 = vld [vmem:[%s869 + $0x8] sm:$0xf]
        %v1743 = vld [vmem:[%s869 + $0xc] sm:$0xf]
        %v1744 = vld [vmem:[%s872] sm:$0x1]
        %v1746 = vperm.slane %v1744, 0
        %v1752 = vunpack.c.l.b16 %v1740
        %v1753 = vunpack.c.l.b16 %v1741
        %v1754 = vunpack.c.l.b16 %v1742
        %v1755 = vunpack.c.l.b16 %v1743
        %v1756 = vpack.c.b16 %v1753, %v1752
        %v1757 = vpack.c.b16 %v1755, %v1754
        %v1761 = vsel %vm1005, %v1739, 0
        %1763 = vmatpush.bf16.msra.mxu0 0
        %1764 = vmatpush.bf16.msra.mxu0 0
        %1765 = vmatpush.bf16.msra.mxu0 0
        %1766 = vmatpush.bf16.msra.mxu0 0
        %1767 = vmatpush.bf16.msra.mxu0 0
        %1768 = vmatpush.bf16.msra.mxu0 0
        %1769 = vmatpush.bf16.msra.mxu0 %v1757
        %1770 = vmatpush.bf16.msra.mxu0 %v1756
        %1771 = vmatmul.bf16.gmra.mxu0 %v1761
        %v1772 = vpop.f32.mrf.mxu0
        %v1773 = vadd.f32 %v1746, %v1772
        %v1774 = vpop.f32.mrf.mxu0
        %1775 = vdwg.mxu0
        %v1776 = vadd.f32 %v982, %v1773
        %v1777 = vld [vmem:[%s875] sm:$0x1]
        %v1778 = vld [vmem:[%s878] sm:$0x1]
        %v1779 = vsel %vm1005, %v1776, 0.0
        %1780 = vadd.xlane.f32.xlu0 %v1779
        %v1781 = vpop.xlane.xlu0 %1780
        %v1782 = vrcp.pop 32.0
        %v1783 = vmul.f32 32.0, %v1782
        %v1784 = vsub.f32 1.0, %v1783
        %v1785 = vmul.f32 %v1782, %v1784
        %v1786 = vadd.f32 %v1782, %v1785
        %vm1787 = vweird.f32 %v1782
        %v1788 = vsel %vm1787, %v1782, %v1786
        %v1789 = vmul.f32 %v1781, %v1788
        %v1790 = vsub.f32 %v1776, %v1789
        %v1791 = vmul.f32 %v1790, %v1790
        %v1792 = vsel %vm1005, %v1791, 0.0
        %1793 = vadd.xlane.f32.xlu0 %v1792
        %v1794 = vpop.xlane.xlu0 %1793
        %v1795 = vmul.f32 %v1794, %v1788
        %v1796 = vadd.f32 %v1795, 1e-05
        %v1797 = vrsqrt.pop %v1796
        %v1798 = vmul.f32 %v1797, %v1796
        %v1799 = vmul.f32 %v1798, %v1797
        %v1800 = vmul.f32 0.5, %v1799
        %v1801 = vsub.f32 1.5, %v1800
        %v1802 = vmul.f32 %v1797, %v1801
        %vm1803 = vweird.f32 %v1796
        %vm1804 = vweird.f32 %v1797
        %vm1805 = vmor %vm1803, %vm1804
        %v1806 = vsel %vm1805, %v1797, %v1802
        %v1807 = vmul.f32 %v1790, %v1806
        %v1809 = vperm.slane %v1777, 0
        %v1811 = vmul.f32 %v1807, %v1809
        %v1813 = vperm.slane %v1778, 0
        %v1815 = vadd.f32 %v1811, %v1813
        %v1816 = vpack.c.bf16 %v1815, %v1815
        %v1817 = vld [vmem:[%s883] sm:$0xf]
        %v1818 = vld [vmem:[%s883 + $0x4] sm:$0xf]
        %v1819 = vld [vmem:[%s883 + $0x8] sm:$0xf]
        %v1820 = vld [vmem:[%s883 + $0xc] sm:$0xf]
        %v1821 = vld [vmem:[%s886] sm:$0x1]
        %v1823 = vperm.slane %v1821, 0
        %v1829 = vunpack.c.l.b16 %v1817
        %v1830 = vunpack.c.l.b16 %v1818
        %v1831 = vunpack.c.l.b16 %v1819
        %v1832 = vunpack.c.l.b16 %v1820
        %v1833 = vpack.c.b16 %v1830, %v1829
        %v1834 = vpack.c.b16 %v1832, %v1831
        %v1838 = vsel %vm1005, %v1816, 0
        %1840 = vmatpush.bf16.msra.mxu0 0
        %1841 = vmatpush.bf16.msra.mxu0 0
        %1842 = vmatpush.bf16.msra.mxu0 0
        %1843 = vmatpush.bf16.msra.mxu0 0
        %1844 = vmatpush.bf16.msra.mxu0 0
        %1845 = vmatpush.bf16.msra.mxu0 0
        %1846 = vmatpush.bf16.msra.mxu0 %v1834
        %1847 = vmatpush.bf16.msra.mxu0 %v1833
        %1848 = vmatmul.bf16.gmra.mxu0 %v1838
        %v1849 = vpop.f32.mrf.mxu0
        %v1850 = vadd.f32 %v1823, %v1849
        %v1851 = vpop.f32.mrf.mxu0
        %1852 = vdwg.mxu0
        %v1853 = vmax.f32 %v1850, 0.0
        %v1854 = vpack.c.bf16 %v1853, %v1853
        %v1855 = vld [vmem:[%s891] sm:$0xf]
        %v1856 = vld [vmem:[%s891 + $0x4] sm:$0xf]
        %v1857 = vld [vmem:[%s891 + $0x8] sm:$0xf]
        %v1858 = vld [vmem:[%s891 + $0xc] sm:$0xf]
        %v1859 = vld [vmem:[%s891 + $0x10] sm:$0xf]
        %v1860 = vld [vmem:[%s891 + $0x14] sm:$0xf]
        %v1861 = vld [vmem:[%s891 + $0x18] sm:$0xf]
        %v1862 = vld [vmem:[%s891 + $0x1c] sm:$0xf]
        %v1863 = vld [vmem:[%s894] sm:$0x1]
        %v1865 = vperm.slane %v1863, 0
        %v1875 = vunpack.c.l.b16 %v1855
        %v1876 = vunpack.c.l.b16 %v1856
        %v1877 = vunpack.c.l.b16 %v1857
        %v1878 = vunpack.c.l.b16 %v1858
        %v1879 = vunpack.c.l.b16 %v1859
        %v1880 = vunpack.c.l.b16 %v1860
        %v1881 = vunpack.c.l.b16 %v1861
        %v1882 = vunpack.c.l.b16 %v1862
        %v1883 = vpack.c.b16 %v1876, %v1875
        %v1884 = vpack.c.b16 %v1878, %v1877
        %v1885 = vpack.c.b16 %v1880, %v1879
        %v1886 = vpack.c.b16 %v1882, %v1881
        %vm1891 = vcmask 523264
        %v1893 = vsel %vm1891, %v1854, 0
        %1895 = vmatpush.bf16.msra.mxu0 0
        %1896 = vmatpush.bf16.msra.mxu0 0
        %1897 = vmatpush.bf16.msra.mxu0 0
        %1898 = vmatpush.bf16.msra.mxu0 0
        %1899 = vmatpush.bf16.msra.mxu0 %v1886
        %1900 = vmatpush.bf16.msra.mxu0 %v1885
        %1901 = vmatpush.bf16.msra.mxu0 %v1884
        %1902 = vmatpush.bf16.msra.mxu0 %v1883
        %1903 = vmatmul.bf16.gmra.mxu0 %v1893
        %v1904 = vpop.f32.mrf.mxu0
        %v1905 = vadd.f32 %v1865, %v1904
        %v1906 = vpop.f32.mrf.mxu0
        %1907 = vdwg.mxu0
        %v1908 = vadd.f32 %v1815, %v1905
        %v1909 = vld [vmem:[%s897] sm:$0x1]
        %v1910 = vld [vmem:[%s754] sm:$0x1]
        %v1911 = vsel %vm1005, %v1908, 0.0
        %1912 = vadd.xlane.f32.xlu0 %v1911
        %v1913 = vpop.xlane.xlu0 %1912
        %v1914 = vmul.f32 %v1913, %v1788
        %v1915 = vsub.f32 %v1908, %v1914
        %v1916 = vmul.f32 %v1915, %v1915
        %v1917 = vsel %vm1005, %v1916, 0.0
        %1918 = vadd.xlane.f32.xlu0 %v1917
        %v1919 = vpop.xlane.xlu0 %1918
        %v1920 = vmul.f32 %v1919, %v1788
        %v1921 = vadd.f32 %v1920, 1e-05
        %v1922 = vrsqrt.pop %v1921
        %v1923 = vmul.f32 %v1922, %v1921
        %v1924 = vmul.f32 %v1923, %v1922
        %v1925 = vmul.f32 0.5, %v1924
        %v1926 = vsub.f32 1.5, %v1925
        %v1927 = vmul.f32 %v1922, %v1926
        %vm1928 = vweird.f32 %v1921
        %vm1929 = vweird.f32 %v1922
        %vm1930 = vmor %vm1928, %vm1929
        %v1931 = vsel %vm1930, %v1922, %v1927
        %v1932 = vmul.f32 %v1915, %v1931
        %v1934 = vperm.slane %v1909, 0
        %v1936 = vmul.f32 %v1932, %v1934
        %v1938 = vperm.slane %v1910, 0
        %v1940 = vadd.f32 %v1936, %v1938
        %1941 = vst.msk [vmem:[%s856] sm:$0xff] %vm1005, %v1940
        %s1942 = sand.u32 %s510, 1
        %s1943 = scalar_lea.sflag [#allocation4], %s1942
        %s1944 = sand.u32 %s510, 1
        %s1945 = smul.addr %s1944, 8
        %s1946 = scalar_lea.vmem [#allocation13], %s1945
        // Predicated region
        $region121: #{tpu_custom_call.1} parent=91 // pred_check
          %p1947 = pneg %p520
        $region122: #{tpu_custom_call.1} parent=91 // pred_check_branch
          %1949 = sbr.rel (%p1947) target = $region124
        $region123: #{tpu_custom_call.1} parent=91 // pred_region
          %1951 = vsyncadd %s1943, 0
          %s1952 = smul.addr %s46, 8
          %s1953 = scalar_lea.hbm %s18, %s1952
          %s1955 = sshll.u32 %s1946, 4
          %s1956 = int_to_ptr.vmem [resolvable:$true] %s1955
          %s1957 = sshll.u32 %s1953, 4
          %s1958 = int_to_ptr.hbm [resolvable:$true] %s1957
          %1960 = dma.vmem_to_hbm [thread:$0]  %s1956, 128, %s1958, %s1943
        $region124: #{tpu_custom_call.1} parent=91 // pred_fallthru
          _
      $region92: #{tpu_custom_call.1} parent=5 // pred_fallthru
        _
      %p1961 = scmp.le.s32.totalorder 2, %s37
      // Predicated region
      $region125: #{tpu_custom_call.1} parent=5 // pred_check
        %p1962 = pneg %p1961
      $region126: #{tpu_custom_call.1} parent=5 // pred_check_branch
        %1964 = sbr.rel (%p1962) target = $region128
      $region127: #{tpu_custom_call.1} parent=5 // pred_region
        %s1965 = ssub.s32 %s37, 2
        // Predicated region
        $region129: #{tpu_custom_call.1} parent=127 // pred_check
          %p1966 = pneg %p526
        $region130: #{tpu_custom_call.1} parent=127 // pred_check_branch
          %1968 = sbr.rel (%p1966) target = $region132
        $region131: #{tpu_custom_call.1} parent=127 // pred_region
          %s1969 = sand.u32 %s511, 1
          %s1970 = scalar_lea.sflag [#allocation4], %s1969
          %s1971 = sand.u32 %s511, 1
          %s1972 = smul.addr %s1971, 8
          %s1973 = scalar_lea.vmem [#allocation13], %s1972
          %1975 = dma.done %s1970, 128
        $region132: #{tpu_custom_call.1} parent=127 // pred_fallthru
          _
      $region128: #{tpu_custom_call.1} parent=5 // pred_fallthru
        _
    $region6: #{tpu_custom_call.1} parent=1 // loop_footer
      %s41 = sadd.s32 1, %s37
    $region7: #{tpu_custom_call.1} parent=1 // loop_footer_branch
      %36 = sbr.rel target = $region3
    $region8: #{tpu_custom_call.1} parent=1 // loop_exit
      _
    %1976 = vsyncpa [#allocation3], 1
    %s1977 = scalar_lea.sflag [#allocation3], 1
    %1978 = vsyncpa %s1977, 1
    %1979 = vsyncpa [#allocation6], 1
    %s1980 = scalar_lea.sflag [#allocation6], 1
    %1981 = vsyncpa %s1980, 1
    %1982 = vsyncpa [#allocation9], 1
    %1983 = vsyncpa [#allocation12], 1
    %s1984 = scalar_lea.sflag [#allocation12], 1
    %1985 = vsyncpa %s1984, 1
    %1986 = vsyncpa [#allocation4], 1
    %s1987 = scalar_lea.sflag [#allocation4], 1
    %1988 = vsyncpa %s1987, 1

</llo_original>
